<compile_context>
chip_gen: v5e
topology: v5e:2x2
jax: 0.10.0
libtpu: 0.0.40
codegen_flags: <defaults>
</compile_context>

<pallas_src>
import functools

import jax
import jax.numpy as jnp
from jax import lax
from jax.experimental import pallas as pl
from jax.experimental.pallas import tpu as pltpu

_LANE = 128          # TPU lane width: feature dims are zero-padded to multiples of this
_NEG_BIG = -1e30


def _encoder_kernel(x_ref, adj_ref, *refs, num_layers, include_linear,
                    include_activation, tile_m, tile_n):
    n_per_layer = 10 if include_linear else 8
    param_refs = refs[:num_layers * n_per_layer]
    out_ref = refs[num_layers * n_per_layer]
    hbuf = refs[num_layers * n_per_layer + 1]      # VMEM scratch [N, Hpad] f32

    n = out_ref.shape[0]

    # Edge-count matrix (dst x src): loaded once (int8 in HBM), reused by every layer.
    cnt = adj_ref[...].astype(jnp.float32)         # [N, N]
    edge_mask = cnt > 0.0

    h = x_ref[...]                                 # f32 [N, Fpad]

    for layer in range(num_layers):
        base = layer * n_per_layer
        wl = param_refs[base + 0][...]             # bf16 [Fin, H]
        bl = param_refs[base + 1][...]             # f32  [1, H]
        wr = param_refs[base + 2][...]             # bf16 [Fin, H]
        br = param_refs[base + 3][...]             # f32  [1, H]
        att = param_refs[base + 4][...]            # f32  [1, H]
        cb = param_refs[base + 5][...]             # f32  [1, H]
        if include_linear:
            lw = param_refs[base + 6][...]         # bf16 [H, H]
            lb = param_refs[base + 7][...]         # f32  [1, H]
            bn_w = param_refs[base + 8][...]
            bn_b = param_refs[base + 9][...]
        else:
            bn_w = param_refs[base + 6][...]
            bn_b = param_refs[base + 7][...]

        # ---- GATv2Conv: node transforms (bf16 MXU, f32 accumulation) ----
        hb = h.astype(jnp.bfloat16)
        xl = jnp.dot(hb, wl, preferred_element_type=jnp.float32) + bl   # lin_l (src)
        xr = jnp.dot(hb, wr, preferred_element_type=jnp.float32) + br   # lin_r (dst)
        xl_b = xl.astype(jnp.bfloat16)

        # leaky_relu(v, 0.2) == 0.6*v + 0.4*|v|, so
        #   score[i,j] = 0.6*(sr[i] + sl[j]) + 0.4 * sum_h att[h] * |xl[j,h] + xr[i,h]|
        # and only the |.| term is pairwise work.
        sr = jnp.sum(xr * att, axis=-1, keepdims=True)                  # [N, 1]
        att8 = jnp.broadcast_to(att, (8, att.shape[1]))                 # keep MXU M-dim >= 8
        sl_row = lax.dot_general(att8, xl, (((1,), (1,)), ((), ())),
                                 preferred_element_type=jnp.float32)[0:1, :]   # [1, N]
        att3 = att.reshape(1, 1, -1)

        # ---- Flash-style tiled masked softmax + aggregation over (dst, src) tiles ----
        for r0 in range(0, n, tile_m):
            r1 = min(r0 + tile_m, n)
            tm = r1 - r0
            xr_t = xr[r0:r1]
            sr_t = sr[r0:r1]
            m_run = jnp.full((tm, 1), _NEG_BIG, jnp.float32)
            l_run = jnp.zeros((tm, 1), jnp.float32)
            acc = jnp.zeros((tm, xl.shape[1]), jnp.float32)
            for c0 in range(0, n, tile_n):
                c1 = min(c0 + tile_n, n)
                xl_c = xl[c0:c1]
                zabs = jnp.abs(xl_c[None, :, :] + xr_t[:, None, :])     # [tm, tn, H]
                s = (0.6 * (sr_t + sl_row[:, c0:c1])
                     + 0.4 * jnp.sum(zabs * att3, axis=-1))             # [tm, tn]
                s = jnp.where(edge_mask[r0:r1, c0:c1], s, _NEG_BIG)     # only for max stability
                m_new = jnp.maximum(m_run, jnp.max(s, axis=-1, keepdims=True))
                scale = jnp.exp(m_run - m_new)
                p = cnt[r0:r1, c0:c1] * jnp.exp(s - m_new)              # dup edges weighted
                l_run = scale * l_run + jnp.sum(p, axis=-1, keepdims=True)
                acc = scale * acc + jnp.dot(p.astype(jnp.bfloat16), xl_b[c0:c1],
                                            preferred_element_type=jnp.float32)
                m_run = m_new
            # Rows with no in-edges have l_run == 0; the clamp keeps them at exactly 0
            # (valid rows always have l_run >= 1, so the clamp never changes them).
            inv_l = pl.reciprocal(jnp.maximum(l_run, 1.0), approx=True)
            hbuf[r0:r1, :] = acc * inv_l + cb

        h = hbuf[...]

        # ---- x += lin(x)  (applied to the conv output, exactly as in the PyTorch forward) ----
        if include_linear:
            h = h + jnp.dot(h.astype(jnp.bfloat16), lw,
                            preferred_element_type=jnp.float32) + lb

        # ---- BatchNorm1d, training-mode forward (batch mean, biased variance, eps=1e-5) ----
        # TODO(synk): nn.BatchNorm1d's running-mean/var bookkeeping is stateful and not
        # reproduced; only the normalization math of the forward pass is implemented.
        mean = jnp.mean(h, axis=0, keepdims=True)
        var = jnp.mean((h - mean) ** 2, axis=0, keepdims=True)
        h = (h - mean) * lax.rsqrt(var + 1e-5) * bn_w + bn_b

        # ---- optional ReLU (all layers except the last) ----
        if include_activation and layer < num_layers - 1:
            h = jnp.maximum(h, 0.0)

    out_ref[...] = h


def _round_up(v, m):
    return (v + m - 1) // m * m


def _pad_axis(a, target, axis):
    pad = target - a.shape[axis]
    if pad <= 0:
        return a
    widths = [(0, 0)] * a.ndim
    widths[axis] = (0, pad)
    return jnp.pad(a, widths)


@functools.partial(jax.jit, static_argnames=("include_linear_layers",
                                             "include_activation_layers",
                                             "tile_m", "tile_n"))
def encoder_forward(x, adj, params, *, include_linear_layers,
                    include_activation_layers, tile_m=128, tile_n=128):
    """x: [N, F] node features; adj[dst, src]: integer edge counts (int8)."""
    n, f_in = x.shape
    hidden = params[0]["wl"].shape[1]
    f_pad = _round_up(f_in, _LANE)
    h_pad = _round_up(hidden, _LANE)
    num_layers = len(params)

    # Lane-dense zero padding of all feature dims (transparent to the math; padded BN lanes
    # stay exactly 0 through every layer and are sliced off at the end).
    xp = _pad_axis(x.astype(jnp.float32), f_pad, 1)
    adj_i8 = adj.astype(jnp.int8)

    flat = []
    for layer, p in enumerate(params):
        fin_pad = f_pad if layer == 0 else h_pad
        flat += [
            _pad_axis(_pad_axis(p["wl"], fin_pad, 0), h_pad, 1).astype(jnp.bfloat16),
            _pad_axis(p["bl"], h_pad, 1).astype(jnp.float32),
            _pad_axis(_pad_axis(p["wr"], fin_pad, 0), h_pad, 1).astype(jnp.bfloat16),
            _pad_axis(p["br"], h_pad, 1).astype(jnp.float32),
            _pad_axis(p["att"], h_pad, 1).astype(jnp.float32),
            _pad_axis(p["conv_b"], h_pad, 1).astype(jnp.float32),
        ]
        if include_linear_layers:      # dead weights are not DMA'd when linear is disabled
            flat += [
                _pad_axis(_pad_axis(p["lin_w"], h_pad, 0), h_pad, 1).astype(jnp.bfloat16),
                _pad_axis(p["lin_b"], h_pad, 1).astype(jnp.float32),
            ]
        flat += [
            _pad_axis(p["bn_w"], h_pad, 1).astype(jnp.float32),
            _pad_axis(p["bn_b"], h_pad, 1).astype(jnp.float32),
        ]

    kernel = functools.partial(
        _encoder_kernel,
        num_layers=num_layers,
        include_linear=include_linear_layers,
        include_activation=include_activation_layers,
        tile_m=min(tile_m, n),
        tile_n=min(tile_n, n),
    )
    vm = pl.BlockSpec(memory_space=pltpu.MemorySpace.VMEM)
    out = pl.pallas_call(
        kernel,
        out_shape=jax.ShapeDtypeStruct((n, h_pad), jnp.float32),
        in_specs=[vm] * (2 + len(flat)),
        out_specs=vm,
        scratch_shapes=[pltpu.VMEM((n, h_pad), jnp.float32)],
        # Explicit VMEM budget with headroom: valid on v7x (64 MiB physical) and v5e/v6e.
        compiler_params=pltpu.CompilerParams(vmem_limit_bytes=32 * 1024 * 1024),
    )(xp, adj_i8, *flat)
    return out[:, :hidden]


def init_params(key, in_features, hidden, num_layers):
    def glorot(kk, shape):
        fan_in, fan_out = shape
        s = (6.0 / (fan_in + fan_out)) ** 0.5
        return jax.random.uniform(kk, shape, jnp.float32, -s, s)

    params = []
    f_in = in_features
    for i in range(num_layers):
        k = jax.random.fold_in(key, i)
        ks = jax.random.split(k, 4)
        params.append({
            # GATv2Conv: lin_l / lin_r (lazy in_channels resolved to f_in), att, bias
            "wl": glorot(ks[0], (f_in, hidden)),
            "bl": jnp.zeros((1, hidden), jnp.float32),
            "wr": glorot(ks[1], (f_in, hidden)),
            "br": jnp.zeros((1, hidden), jnp.float32),
            "att": glorot(ks[2], (1, hidden)),
            "conv_b": jnp.zeros((1, hidden), jnp.float32),
            # Linear(-1, hidden) applied to the conv output -> (hidden, hidden)
            "lin_w": glorot(ks[3], (hidden, hidden)),
            "lin_b": jnp.zeros((1, hidden), jnp.float32),
            # BatchNorm1d default init
            "bn_w": jnp.ones((1, hidden), jnp.float32),
            "bn_b": jnp.zeros((1, hidden), jnp.float32),
        })
        f_in = hidden
    return params


if __name__ == "__main__":
    key = jax.random.PRNGKey(0)
    N, F, HIDDEN, NUM_LAYERS, E = 16, 8, 32, 2, 48

    kx, ke, kp = jax.random.split(key, 3)
    x = jax.random.normal(kx, (N, F), jnp.float32)

    # edge_index (PyG convention: row 0 = source, row 1 = destination)
    src = jax.random.randint(jax.random.fold_in(ke, 0), (E,), 0, N)
    dst = jax.random.randint(jax.random.fold_in(ke, 1), (E,), 0, N)
    edge_index = jnp.stack([src, dst], axis=0)
    # Dense int8 adjacency with EDGE COUNTS so duplicate edges are weighted like
    # PyG's per-destination segment softmax.
    adj = jnp.zeros((N, N), jnp.int8).at[edge_index[1], edge_index[0]].add(1)

    params = init_params(kp, F, HIDDEN, NUM_LAYERS)

    out = encoder_forward(x, adj, params,
                          include_linear_layers=True,
                          include_activation_layers=True)
    jax.block_until_ready(out)
    assert out.shape == (N, HIDDEN)
    print("KERNEL_OK")
</pallas_src>

<mosaic_0001>
module attributes {stable_mosaic.version = 11 : i64} {
  func.func @_encoder_kernel(%arg0: memref<16x128xf32, #tpu.memory_space<vmem>>, %arg1: memref<16x16xi8, #tpu.memory_space<vmem>>, %arg2: memref<128x128xbf16, #tpu.memory_space<vmem>>, %arg3: memref<1x128xf32, #tpu.memory_space<vmem>>, %arg4: memref<128x128xbf16, #tpu.memory_space<vmem>>, %arg5: memref<1x128xf32, #tpu.memory_space<vmem>>, %arg6: memref<1x128xf32, #tpu.memory_space<vmem>>, %arg7: memref<1x128xf32, #tpu.memory_space<vmem>>, %arg8: memref<128x128xbf16, #tpu.memory_space<vmem>>, %arg9: memref<1x128xf32, #tpu.memory_space<vmem>>, %arg10: memref<1x128xf32, #tpu.memory_space<vmem>>, %arg11: memref<1x128xf32, #tpu.memory_space<vmem>>, %arg12: memref<128x128xbf16, #tpu.memory_space<vmem>>, %arg13: memref<1x128xf32, #tpu.memory_space<vmem>>, %arg14: memref<128x128xbf16, #tpu.memory_space<vmem>>, %arg15: memref<1x128xf32, #tpu.memory_space<vmem>>, %arg16: memref<1x128xf32, #tpu.memory_space<vmem>>, %arg17: memref<1x128xf32, #tpu.memory_space<vmem>>, %arg18: memref<128x128xbf16, #tpu.memory_space<vmem>>, %arg19: memref<1x128xf32, #tpu.memory_space<vmem>>, %arg20: memref<1x128xf32, #tpu.memory_space<vmem>>, %arg21: memref<1x128xf32, #tpu.memory_space<vmem>>, %arg22: memref<16x128xf32, #tpu.memory_space<vmem>>, %arg23: memref<16x128xf32, #tpu.memory_space<vmem>>) attributes {dimension_semantics = [], scalar_prefetch = 0 : i64, scratch_operands = 1 : i64, tpu.core_type = #tpu.core_type<tc>} {
    %c0 = arith.constant 0 : index
    %c0_0 = arith.constant 0 : index
    %0 = vector.load %arg1[%c0, %c0_0] : memref<16x16xi8, #tpu.memory_space<vmem>>, vector<16x16xi8>
    %1 = arith.sitofp %0 : vector<16x16xi8> to vector<16x16xf32>
    %cst = arith.constant 0.000000e+00 : f32
    %2 = vector.broadcast %cst : f32 to vector<16x16xf32>
    %3 = arith.cmpf ogt, %1, %2 : vector<16x16xf32>
    %c0_1 = arith.constant 0 : index
    %c0_2 = arith.constant 0 : index
    %4 = vector.load %arg0[%c0_1, %c0_2] : memref<16x128xf32, #tpu.memory_space<vmem>>, vector<16x128xf32>
    %c0_3 = arith.constant 0 : index
    %c0_4 = arith.constant 0 : index
    %5 = vector.load %arg2[%c0_3, %c0_4] : memref<128x128xbf16, #tpu.memory_space<vmem>>, vector<128x128xbf16>
    %c0_5 = arith.constant 0 : index
    %c0_6 = arith.constant 0 : index
    %6 = vector.load %arg3[%c0_5, %c0_6] : memref<1x128xf32, #tpu.memory_space<vmem>>, vector<1x128xf32>
    %c0_7 = arith.constant 0 : index
    %c0_8 = arith.constant 0 : index
    %7 = vector.load %arg4[%c0_7, %c0_8] : memref<128x128xbf16, #tpu.memory_space<vmem>>, vector<128x128xbf16>
    %c0_9 = arith.constant 0 : index
    %c0_10 = arith.constant 0 : index
    %8 = vector.load %arg5[%c0_9, %c0_10] : memref<1x128xf32, #tpu.memory_space<vmem>>, vector<1x128xf32>
    %c0_11 = arith.constant 0 : index
    %c0_12 = arith.constant 0 : index
    %9 = vector.load %arg6[%c0_11, %c0_12] : memref<1x128xf32, #tpu.memory_space<vmem>>, vector<1x128xf32>
    %c0_13 = arith.constant 0 : index
    %c0_14 = arith.constant 0 : index
    %10 = vector.load %arg7[%c0_13, %c0_14] : memref<1x128xf32, #tpu.memory_space<vmem>>, vector<1x128xf32>
    %c0_15 = arith.constant 0 : index
    %c0_16 = arith.constant 0 : index
    %11 = vector.load %arg8[%c0_15, %c0_16] : memref<128x128xbf16, #tpu.memory_space<vmem>>, vector<128x128xbf16>
    %c0_17 = arith.constant 0 : index
    %c0_18 = arith.constant 0 : index
    %12 = vector.load %arg9[%c0_17, %c0_18] : memref<1x128xf32, #tpu.memory_space<vmem>>, vector<1x128xf32>
    %c0_19 = arith.constant 0 : index
    %c0_20 = arith.constant 0 : index
    %13 = vector.load %arg10[%c0_19, %c0_20] : memref<1x128xf32, #tpu.memory_space<vmem>>, vector<1x128xf32>
    %c0_21 = arith.constant 0 : index
    %c0_22 = arith.constant 0 : index
    %14 = vector.load %arg11[%c0_21, %c0_22] : memref<1x128xf32, #tpu.memory_space<vmem>>, vector<1x128xf32>
    %15 = arith.truncf %4 : vector<16x128xf32> to vector<16x128xbf16>
    %cst_23 = arith.constant dense<0.000000e+00> : vector<16x128xf32>
    %16 = tpu.matmul %15, %5, %cst_23 {dimension_numbers = #tpu.dot_dimension_numbers<[1], [0], [0], [1], [0, 0, 1, 1], [], []>} : vector<16x128xbf16>, vector<128x128xbf16>, vector<16x128xf32> -> vector<16x128xf32>
    %17 = vector.broadcast %6 : vector<1x128xf32> to vector<16x128xf32>
    %18 = arith.addf %16, %17 : vector<16x128xf32>
    %cst_24 = arith.constant dense<0.000000e+00> : vector<16x128xf32>
    %19 = tpu.matmul %15, %7, %cst_24 {dimension_numbers = #tpu.dot_dimension_numbers<[1], [0], [0], [1], [0, 0, 1, 1], [], []>} : vector<16x128xbf16>, vector<128x128xbf16>, vector<16x128xf32> -> vector<16x128xf32>
    %20 = vector.broadcast %8 : vector<1x128xf32> to vector<16x128xf32>
    %21 = arith.addf %19, %20 : vector<16x128xf32>
    %22 = arith.truncf %18 : vector<16x128xf32> to vector<16x128xbf16>
    %23 = vector.broadcast %9 : vector<1x128xf32> to vector<16x128xf32>
    %24 = arith.mulf %21, %23 : vector<16x128xf32>
    %cst_25 = arith.constant dense<0.000000e+00> : vector<16xf32>
    %25 = vector.multi_reduction <add>, %24, %cst_25 [1] : vector<16x128xf32> to vector<16xf32>
    %26 = vector.shape_cast %25 : vector<16xf32> to vector<16x1xf32>
    %27 = vector.shape_cast %9 : vector<1x128xf32> to vector<1x128xf32>
    %28 = vector.broadcast %27 : vector<1x128xf32> to vector<8x128xf32>
    %cst_26 = arith.constant dense<0.000000e+00> : vector<8x16xf32>
    %29 = tpu.matmul %28, %18, %cst_26 {dimension_numbers = #tpu.dot_dimension_numbers<[1], [1], [0], [0], [0, 0, 1, 0], [], []>} : vector<8x128xf32>, vector<16x128xf32>, vector<8x16xf32> -> vector<8x16xf32>
    %30 = vector.extract_strided_slice %29 {offsets = [0, 0], sizes = [1, 16], strides = [1, 1]} : vector<8x16xf32> to vector<1x16xf32>
    %31 = vector.shape_cast %9 : vector<1x128xf32> to vector<1x1x128xf32>
    %cst_27 = arith.constant -1.000000e+30 : f32
    %32 = vector.broadcast %cst_27 : f32 to vector<16x1xf32>
    %cst_28 = arith.constant 0.000000e+00 : f32
    %33 = vector.broadcast %cst_28 : f32 to vector<16x1xf32>
    %cst_29 = arith.constant 0.000000e+00 : f32
    %34 = vector.broadcast %cst_29 : f32 to vector<16x128xf32>
    %35 = vector.shape_cast %18 : vector<16x128xf32> to vector<1x16x128xf32>
    %36 = vector.shape_cast %21 : vector<16x128xf32> to vector<16x1x128xf32>
    %37 = vector.broadcast %35 : vector<1x16x128xf32> to vector<16x16x128xf32>
    %38 = vector.broadcast %36 : vector<16x1x128xf32> to vector<16x16x128xf32>
    %39 = arith.addf %37, %38 : vector<16x16x128xf32>
    %40 = math.absf %39 : vector<16x16x128xf32>
    %41 = vector.broadcast %26 : vector<16x1xf32> to vector<16x16xf32>
    %42 = vector.broadcast %30 : vector<1x16xf32> to vector<16x16xf32>
    %43 = arith.addf %41, %42 : vector<16x16xf32>
    %cst_30 = arith.constant 6.000000e-01 : f32
    %44 = vector.broadcast %cst_30 : f32 to vector<16x16xf32>
    %45 = arith.mulf %44, %43 : vector<16x16xf32>
    %46 = vector.broadcast %31 : vector<1x1x128xf32> to vector<16x16x128xf32>
    %47 = arith.mulf %40, %46 : vector<16x16x128xf32>
    %cst_31 = arith.constant dense<0.000000e+00> : vector<16x16xf32>
    %48 = vector.multi_reduction <add>, %47, %cst_31 [2] : vector<16x16x128xf32> to vector<16x16xf32>
    %cst_32 = arith.constant 4.000000e-01 : f32
    %49 = vector.broadcast %cst_32 : f32 to vector<16x16xf32>
    %50 = arith.mulf %49, %48 : vector<16x16xf32>
    %51 = arith.addf %45, %50 : vector<16x16xf32>
    %cst_33 = arith.constant -1.000000e+30 : f32
    %52 = vector.broadcast %cst_33 : f32 to vector<16x16xf32>
    %53 = arith.select %3, %51, %52 : vector<16x16xi1>, vector<16x16xf32>
    %cst_34 = arith.constant dense<0xFF800000> : vector<16xf32>
    %54 = vector.multi_reduction <maximumf>, %53, %cst_34 [1] : vector<16x16xf32> to vector<16xf32>
    %55 = vector.shape_cast %54 : vector<16xf32> to vector<16x1xf32>
    %56 = arith.maximumf %32, %55 : vector<16x1xf32>
    %57 = arith.subf %32, %56 : vector<16x1xf32>
    %58 = math.exp %57 : vector<16x1xf32>
    %59 = vector.broadcast %56 : vector<16x1xf32> to vector<16x16xf32>
    %60 = arith.subf %53, %59 : vector<16x16xf32>
    %61 = math.exp %60 : vector<16x16xf32>
    %62 = arith.mulf %1, %61 : vector<16x16xf32>
    %63 = arith.mulf %58, %33 : vector<16x1xf32>
    %cst_35 = arith.constant dense<0.000000e+00> : vector<16xf32>
    %64 = vector.multi_reduction <add>, %62, %cst_35 [1] : vector<16x16xf32> to vector<16xf32>
    %65 = vector.shape_cast %64 : vector<16xf32> to vector<16x1xf32>
    %66 = arith.addf %63, %65 : vector<16x1xf32>
    %67 = vector.broadcast %58 : vector<16x1xf32> to vector<16x128xf32>
    %68 = arith.mulf %67, %34 : vector<16x128xf32>
    %69 = arith.truncf %62 : vector<16x16xf32> to vector<16x16xbf16>
    %cst_36 = arith.constant dense<0.000000e+00> : vector<16x128xf32>
    %70 = tpu.matmul %69, %22, %cst_36 {dimension_numbers = #tpu.dot_dimension_numbers<[1], [0], [0], [1], [0, 0, 1, 1], [], []>} : vector<16x16xbf16>, vector<16x128xbf16>, vector<16x128xf32> -> vector<16x128xf32>
    %71 = arith.addf %68, %70 : vector<16x128xf32>
    %cst_37 = arith.constant 1.000000e+00 : f32
    %72 = vector.broadcast %cst_37 : f32 to vector<16x1xf32>
    %73 = arith.maximumf %66, %72 : vector<16x1xf32>
    %74 = tpu.reciprocal %73 {approx = true} : vector<16x1xf32> -> vector<16x1xf32>
    %75 = vector.broadcast %74 : vector<16x1xf32> to vector<16x128xf32>
    %76 = arith.mulf %71, %75 : vector<16x128xf32>
    %77 = vector.broadcast %10 : vector<1x128xf32> to vector<16x128xf32>
    %78 = arith.addf %76, %77 : vector<16x128xf32>
    %c0_38 = arith.constant 0 : index
    %c0_39 = arith.constant 0 : index
    %79 = vector.load %arg23[%c0_38, %c0_39] : memref<16x128xf32, #tpu.memory_space<vmem>>, vector<16x128xf32>
    tpu.vector_store %arg23[%c0_38, %c0_39], %78 {strides = array<i32>} : memref<16x128xf32, #tpu.memory_space<vmem>>, vector<16x128xf32>,
    %c0_40 = arith.constant 0 : index
    %c0_41 = arith.constant 0 : index
    %80 = vector.load %arg23[%c0_40, %c0_41] : memref<16x128xf32, #tpu.memory_space<vmem>>, vector<16x128xf32>
    %81 = arith.truncf %80 : vector<16x128xf32> to vector<16x128xbf16>
    %cst_42 = arith.constant dense<0.000000e+00> : vector<16x128xf32>
    %82 = tpu.matmul %81, %11, %cst_42 {dimension_numbers = #tpu.dot_dimension_numbers<[1], [0], [0], [1], [0, 0, 1, 1], [], []>} : vector<16x128xbf16>, vector<128x128xbf16>, vector<16x128xf32> -> vector<16x128xf32>
    %83 = arith.addf %80, %82 : vector<16x128xf32>
    %84 = vector.broadcast %12 : vector<1x128xf32> to vector<16x128xf32>
    %85 = arith.addf %83, %84 : vector<16x128xf32>
    %cst_43 = arith.constant dense<0.000000e+00> : vector<128xf32>
    %86 = vector.multi_reduction <add>, %85, %cst_43 [0] : vector<16x128xf32> to vector<128xf32>
    %87 = vector.shape_cast %86 : vector<128xf32> to vector<1x128xf32>
    %cst_44 = arith.constant 1.600000e+01 : f32
    %88 = vector.broadcast %cst_44 : f32 to vector<1x128xf32>
    %89 = arith.divf %87, %88 : vector<1x128xf32>
    %90 = vector.broadcast %89 : vector<1x128xf32> to vector<16x128xf32>
    %91 = arith.subf %85, %90 : vector<16x128xf32>
    %92 = arith.mulf %91, %91 : vector<16x128xf32>
    %cst_45 = arith.constant dense<0.000000e+00> : vector<128xf32>
    %93 = vector.multi_reduction <add>, %92, %cst_45 [0] : vector<16x128xf32> to vector<128xf32>
    %94 = vector.shape_cast %93 : vector<128xf32> to vector<1x128xf32>
    %cst_46 = arith.constant 1.600000e+01 : f32
    %95 = vector.broadcast %cst_46 : f32 to vector<1x128xf32>
    %96 = arith.divf %94, %95 : vector<1x128xf32>
    %97 = vector.broadcast %89 : vector<1x128xf32> to vector<16x128xf32>
    %98 = arith.subf %85, %97 : vector<16x128xf32>
    %cst_47 = arith.constant 9.99999974E-6 : f32
    %99 = vector.broadcast %cst_47 : f32 to vector<1x128xf32>
    %100 = arith.addf %96, %99 : vector<1x128xf32>
    %101 = math.rsqrt %100 : vector<1x128xf32>
    %102 = vector.broadcast %101 : vector<1x128xf32> to vector<16x128xf32>
    %103 = arith.mulf %98, %102 : vector<16x128xf32>
    %104 = vector.broadcast %13 : vector<1x128xf32> to vector<16x128xf32>
    %105 = arith.mulf %103, %104 : vector<16x128xf32>
    %106 = vector.broadcast %14 : vector<1x128xf32> to vector<16x128xf32>
    %107 = arith.addf %105, %106 : vector<16x128xf32>
    %cst_48 = arith.constant 0.000000e+00 : f32
    %108 = vector.broadcast %cst_48 : f32 to vector<16x128xf32>
    %109 = arith.maximumf %107, %108 : vector<16x128xf32>
    %c0_49 = arith.constant 0 : index
    %c0_50 = arith.constant 0 : index
    %110 = vector.load %arg12[%c0_49, %c0_50] : memref<128x128xbf16, #tpu.memory_space<vmem>>, vector<128x128xbf16>
    %c0_51 = arith.constant 0 : index
    %c0_52 = arith.constant 0 : index
    %111 = vector.load %arg13[%c0_51, %c0_52] : memref<1x128xf32, #tpu.memory_space<vmem>>, vector<1x128xf32>
    %c0_53 = arith.constant 0 : index
    %c0_54 = arith.constant 0 : index
    %112 = vector.load %arg14[%c0_53, %c0_54] : memref<128x128xbf16, #tpu.memory_space<vmem>>, vector<128x128xbf16>
    %c0_55 = arith.constant 0 : index
    %c0_56 = arith.constant 0 : index
    %113 = vector.load %arg15[%c0_55, %c0_56] : memref<1x128xf32, #tpu.memory_space<vmem>>, vector<1x128xf32>
    %c0_57 = arith.constant 0 : index
    %c0_58 = arith.constant 0 : index
    %114 = vector.load %arg16[%c0_57, %c0_58] : memref<1x128xf32, #tpu.memory_space<vmem>>, vector<1x128xf32>
    %c0_59 = arith.constant 0 : index
    %c0_60 = arith.constant 0 : index
    %115 = vector.load %arg17[%c0_59, %c0_60] : memref<1x128xf32, #tpu.memory_space<vmem>>, vector<1x128xf32>
    %c0_61 = arith.constant 0 : index
    %c0_62 = arith.constant 0 : index
    %116 = vector.load %arg18[%c0_61, %c0_62] : memref<128x128xbf16, #tpu.memory_space<vmem>>, vector<128x128xbf16>
    %c0_63 = arith.constant 0 : index
    %c0_64 = arith.constant 0 : index
    %117 = vector.load %arg19[%c0_63, %c0_64] : memref<1x128xf32, #tpu.memory_space<vmem>>, vector<1x128xf32>
    %c0_65 = arith.constant 0 : index
    %c0_66 = arith.constant 0 : index
    %118 = vector.load %arg20[%c0_65, %c0_66] : memref<1x128xf32, #tpu.memory_space<vmem>>, vector<1x128xf32>
    %c0_67 = arith.constant 0 : index
    %c0_68 = arith.constant 0 : index
    %119 = vector.load %arg21[%c0_67, %c0_68] : memref<1x128xf32, #tpu.memory_space<vmem>>, vector<1x128xf32>
    %120 = arith.truncf %109 : vector<16x128xf32> to vector<16x128xbf16>
    %cst_69 = arith.constant dense<0.000000e+00> : vector<16x128xf32>
    %121 = tpu.matmul %120, %110, %cst_69 {dimension_numbers = #tpu.dot_dimension_numbers<[1], [0], [0], [1], [0, 0, 1, 1], [], []>} : vector<16x128xbf16>, vector<128x128xbf16>, vector<16x128xf32> -> vector<16x128xf32>
    %122 = vector.broadcast %111 : vector<1x128xf32> to vector<16x128xf32>
    %123 = arith.addf %121, %122 : vector<16x128xf32>
    %cst_70 = arith.constant dense<0.000000e+00> : vector<16x128xf32>
    %124 = tpu.matmul %120, %112, %cst_70 {dimension_numbers = #tpu.dot_dimension_numbers<[1], [0], [0], [1], [0, 0, 1, 1], [], []>} : vector<16x128xbf16>, vector<128x128xbf16>, vector<16x128xf32> -> vector<16x128xf32>
    %125 = vector.broadcast %113 : vector<1x128xf32> to vector<16x128xf32>
    %126 = arith.addf %124, %125 : vector<16x128xf32>
    %127 = arith.truncf %123 : vector<16x128xf32> to vector<16x128xbf16>
    %128 = vector.broadcast %114 : vector<1x128xf32> to vector<16x128xf32>
    %129 = arith.mulf %126, %128 : vector<16x128xf32>
    %cst_71 = arith.constant dense<0.000000e+00> : vector<16xf32>
    %130 = vector.multi_reduction <add>, %129, %cst_71 [1] : vector<16x128xf32> to vector<16xf32>
    %131 = vector.shape_cast %130 : vector<16xf32> to vector<16x1xf32>
    %132 = vector.shape_cast %114 : vector<1x128xf32> to vector<1x128xf32>
    %133 = vector.broadcast %132 : vector<1x128xf32> to vector<8x128xf32>
    %cst_72 = arith.constant dense<0.000000e+00> : vector<8x16xf32>
    %134 = tpu.matmul %133, %123, %cst_72 {dimension_numbers = #tpu.dot_dimension_numbers<[1], [1], [0], [0], [0, 0, 1, 0], [], []>} : vector<8x128xf32>, vector<16x128xf32>, vector<8x16xf32> -> vector<8x16xf32>
    %135 = vector.extract_strided_slice %134 {offsets = [0, 0], sizes = [1, 16], strides = [1, 1]} : vector<8x16xf32> to vector<1x16xf32>
    %136 = vector.shape_cast %114 : vector<1x128xf32> to vector<1x1x128xf32>
    %cst_73 = arith.constant -1.000000e+30 : f32
    %137 = vector.broadcast %cst_73 : f32 to vector<16x1xf32>
    %cst_74 = arith.constant 0.000000e+00 : f32
    %138 = vector.broadcast %cst_74 : f32 to vector<16x1xf32>
    %cst_75 = arith.constant 0.000000e+00 : f32
    %139 = vector.broadcast %cst_75 : f32 to vector<16x128xf32>
    %140 = vector.shape_cast %123 : vector<16x128xf32> to vector<1x16x128xf32>
    %141 = vector.shape_cast %126 : vector<16x128xf32> to vector<16x1x128xf32>
    %142 = vector.broadcast %140 : vector<1x16x128xf32> to vector<16x16x128xf32>
    %143 = vector.broadcast %141 : vector<16x1x128xf32> to vector<16x16x128xf32>
    %144 = arith.addf %142, %143 : vector<16x16x128xf32>
    %145 = math.absf %144 : vector<16x16x128xf32>
    %146 = vector.broadcast %131 : vector<16x1xf32> to vector<16x16xf32>
    %147 = vector.broadcast %135 : vector<1x16xf32> to vector<16x16xf32>
    %148 = arith.addf %146, %147 : vector<16x16xf32>
    %cst_76 = arith.constant 6.000000e-01 : f32
    %149 = vector.broadcast %cst_76 : f32 to vector<16x16xf32>
    %150 = arith.mulf %149, %148 : vector<16x16xf32>
    %151 = vector.broadcast %136 : vector<1x1x128xf32> to vector<16x16x128xf32>
    %152 = arith.mulf %145, %151 : vector<16x16x128xf32>
    %cst_77 = arith.constant dense<0.000000e+00> : vector<16x16xf32>
    %153 = vector.multi_reduction <add>, %152, %cst_77 [2] : vector<16x16x128xf32> to vector<16x16xf32>
    %cst_78 = arith.constant 4.000000e-01 : f32
    %154 = vector.broadcast %cst_78 : f32 to vector<16x16xf32>
    %155 = arith.mulf %154, %153 : vector<16x16xf32>
    %156 = arith.addf %150, %155 : vector<16x16xf32>
    %cst_79 = arith.constant -1.000000e+30 : f32
    %157 = vector.broadcast %cst_79 : f32 to vector<16x16xf32>
    %158 = arith.select %3, %156, %157 : vector<16x16xi1>, vector<16x16xf32>
    %cst_80 = arith.constant dense<0xFF800000> : vector<16xf32>
    %159 = vector.multi_reduction <maximumf>, %158, %cst_80 [1] : vector<16x16xf32> to vector<16xf32>
    %160 = vector.shape_cast %159 : vector<16xf32> to vector<16x1xf32>
    %161 = arith.maximumf %137, %160 : vector<16x1xf32>
    %162 = arith.subf %137, %161 : vector<16x1xf32>
    %163 = math.exp %162 : vector<16x1xf32>
    %164 = vector.broadcast %161 : vector<16x1xf32> to vector<16x16xf32>
    %165 = arith.subf %158, %164 : vector<16x16xf32>
    %166 = math.exp %165 : vector<16x16xf32>
    %167 = arith.mulf %1, %166 : vector<16x16xf32>
    %168 = arith.mulf %163, %138 : vector<16x1xf32>
    %cst_81 = arith.constant dense<0.000000e+00> : vector<16xf32>
    %169 = vector.multi_reduction <add>, %167, %cst_81 [1] : vector<16x16xf32> to vector<16xf32>
    %170 = vector.shape_cast %169 : vector<16xf32> to vector<16x1xf32>
    %171 = arith.addf %168, %170 : vector<16x1xf32>
    %172 = vector.broadcast %163 : vector<16x1xf32> to vector<16x128xf32>
    %173 = arith.mulf %172, %139 : vector<16x128xf32>
    %174 = arith.truncf %167 : vector<16x16xf32> to vector<16x16xbf16>
    %cst_82 = arith.constant dense<0.000000e+00> : vector<16x128xf32>
    %175 = tpu.matmul %174, %127, %cst_82 {dimension_numbers = #tpu.dot_dimension_numbers<[1], [0], [0], [1], [0, 0, 1, 1], [], []>} : vector<16x16xbf16>, vector<16x128xbf16>, vector<16x128xf32> -> vector<16x128xf32>
    %176 = arith.addf %173, %175 : vector<16x128xf32>
    %cst_83 = arith.constant 1.000000e+00 : f32
    %177 = vector.broadcast %cst_83 : f32 to vector<16x1xf32>
    %178 = arith.maximumf %171, %177 : vector<16x1xf32>
    %179 = tpu.reciprocal %178 {approx = true} : vector<16x1xf32> -> vector<16x1xf32>
    %180 = vector.broadcast %179 : vector<16x1xf32> to vector<16x128xf32>
    %181 = arith.mulf %176, %180 : vector<16x128xf32>
    %182 = vector.broadcast %115 : vector<1x128xf32> to vector<16x128xf32>
    %183 = arith.addf %181, %182 : vector<16x128xf32>
    %c0_84 = arith.constant 0 : index
    %c0_85 = arith.constant 0 : index
    %184 = vector.load %arg23[%c0_84, %c0_85] : memref<16x128xf32, #tpu.memory_space<vmem>>, vector<16x128xf32>
    tpu.vector_store %arg23[%c0_84, %c0_85], %183 {strides = array<i32>} : memref<16x128xf32, #tpu.memory_space<vmem>>, vector<16x128xf32>,
    %c0_86 = arith.constant 0 : index
    %c0_87 = arith.constant 0 : index
    %185 = vector.load %arg23[%c0_86, %c0_87] : memref<16x128xf32, #tpu.memory_space<vmem>>, vector<16x128xf32>
    %186 = arith.truncf %185 : vector<16x128xf32> to vector<16x128xbf16>
    %cst_88 = arith.constant dense<0.000000e+00> : vector<16x128xf32>
    %187 = tpu.matmul %186, %116, %cst_88 {dimension_numbers = #tpu.dot_dimension_numbers<[1], [0], [0], [1], [0, 0, 1, 1], [], []>} : vector<16x128xbf16>, vector<128x128xbf16>, vector<16x128xf32> -> vector<16x128xf32>
    %188 = arith.addf %185, %187 : vector<16x128xf32>
    %189 = vector.broadcast %117 : vector<1x128xf32> to vector<16x128xf32>
    %190 = arith.addf %188, %189 : vector<16x128xf32>
    %cst_89 = arith.constant dense<0.000000e+00> : vector<128xf32>
    %191 = vector.multi_reduction <add>, %190, %cst_89 [0] : vector<16x128xf32> to vector<128xf32>
    %192 = vector.shape_cast %191 : vector<128xf32> to vector<1x128xf32>
    %cst_90 = arith.constant 1.600000e+01 : f32
    %193 = vector.broadcast %cst_90 : f32 to vector<1x128xf32>
    %194 = arith.divf %192, %193 : vector<1x128xf32>
    %195 = vector.broadcast %194 : vector<1x128xf32> to vector<16x128xf32>
    %196 = arith.subf %190, %195 : vector<16x128xf32>
    %197 = arith.mulf %196, %196 : vector<16x128xf32>
    %cst_91 = arith.constant dense<0.000000e+00> : vector<128xf32>
    %198 = vector.multi_reduction <add>, %197, %cst_91 [0] : vector<16x128xf32> to vector<128xf32>
    %199 = vector.shape_cast %198 : vector<128xf32> to vector<1x128xf32>
    %cst_92 = arith.constant 1.600000e+01 : f32
    %200 = vector.broadcast %cst_92 : f32 to vector<1x128xf32>
    %201 = arith.divf %199, %200 : vector<1x128xf32>
    %202 = vector.broadcast %194 : vector<1x128xf32> to vector<16x128xf32>
    %203 = arith.subf %190, %202 : vector<16x128xf32>
    %cst_93 = arith.constant 9.99999974E-6 : f32
    %204 = vector.broadcast %cst_93 : f32 to vector<1x128xf32>
    %205 = arith.addf %201, %204 : vector<1x128xf32>
    %206 = math.rsqrt %205 : vector<1x128xf32>
    %207 = vector.broadcast %206 : vector<1x128xf32> to vector<16x128xf32>
    %208 = arith.mulf %203, %207 : vector<16x128xf32>
    %209 = vector.broadcast %118 : vector<1x128xf32> to vector<16x128xf32>
    %210 = arith.mulf %208, %209 : vector<16x128xf32>
    %211 = vector.broadcast %119 : vector<1x128xf32> to vector<16x128xf32>
    %212 = arith.addf %210, %211 : vector<16x128xf32>
    %c0_94 = arith.constant 0 : index
    %c0_95 = arith.constant 0 : index
    %213 = vector.load %arg22[%c0_94, %c0_95] : memref<16x128xf32, #tpu.memory_space<vmem>>, vector<16x128xf32>
    tpu.vector_store %arg22[%c0_94, %c0_95], %212 {strides = array<i32>} : memref<16x128xf32, #tpu.memory_space<vmem>>, vector<16x128xf32>,
    return
  }
}

</mosaic_0001>

<llo_original>
// kernel: encoder_forward.1
$region0: #{encoder_forward.1}
  #allocation0 [shape = 'u32[]', space=smem, size = 0x4, offset = 0x4, fixed_abs, tag = 'smem constant byte address 0x4 - core index']
  #allocation1 [shape = 'u32[72,128]{1,0:T(1,128)}', space=vmem, size = 0x9000, scoped, tag = 'internal scratch']
  #allocation2 [shape = 'f32[16,128]{1,0:T(8,128)}', space=vmem, size = 0x2000, scoped, tag = 'scratch operand']
  %s0 = inlined_call_operand.vmem [shape: f32[16,128], index: 0, kind: input, shape index: {}]
  %s1 = inlined_call_operand.vmem [shape: s8[16,16], index: 1, kind: input, shape index: {}]
  %s2 = inlined_call_operand.vmem [shape: bf16[128,128], index: 2, kind: input, shape index: {}]
  %s3 = inlined_call_operand.vmem [shape: f32[1,128], index: 3, kind: input, shape index: {}]
  %s4 = inlined_call_operand.vmem [shape: bf16[128,128], index: 4, kind: input, shape index: {}]
  %s5 = inlined_call_operand.vmem [shape: f32[1,128], index: 5, kind: input, shape index: {}]
  %s6 = inlined_call_operand.vmem [shape: f32[1,128], index: 6, kind: input, shape index: {}]
  %s7 = inlined_call_operand.vmem [shape: f32[1,128], index: 7, kind: input, shape index: {}]
  %s8 = inlined_call_operand.vmem [shape: bf16[128,128], index: 8, kind: input, shape index: {}]
  %s9 = inlined_call_operand.vmem [shape: f32[1,128], index: 9, kind: input, shape index: {}]
  %s10 = inlined_call_operand.vmem [shape: f32[1,128], index: 10, kind: input, shape index: {}]
  %s11 = inlined_call_operand.vmem [shape: f32[1,128], index: 11, kind: input, shape index: {}]
  %s12 = inlined_call_operand.vmem [shape: bf16[128,128], index: 12, kind: input, shape index: {}]
  %s13 = inlined_call_operand.vmem [shape: f32[1,128], index: 13, kind: input, shape index: {}]
  %s14 = inlined_call_operand.vmem [shape: bf16[128,128], index: 14, kind: input, shape index: {}]
  %s15 = inlined_call_operand.vmem [shape: f32[1,128], index: 15, kind: input, shape index: {}]
  %s16 = inlined_call_operand.vmem [shape: f32[1,128], index: 16, kind: input, shape index: {}]
  %s17 = inlined_call_operand.vmem [shape: f32[1,128], index: 17, kind: input, shape index: {}]
  %s18 = inlined_call_operand.vmem [shape: bf16[128,128], index: 18, kind: input, shape index: {}]
  %s19 = inlined_call_operand.vmem [shape: f32[1,128], index: 19, kind: input, shape index: {}]
  %s20 = inlined_call_operand.vmem [shape: f32[1,128], index: 20, kind: input, shape index: {}]
  %s21 = inlined_call_operand.vmem [shape: f32[1,128], index: 21, kind: input, shape index: {}]
  %s22 = inlined_call_operand.hbm [shape: f32[16,128], index: 22, kind: output, shape index: {}]
  %s23 = sld [smem:[#allocation0]]
  $region98: #{encoder_forward.1} parent=0
    _
  %s25 = ssub.s32 1, %s23
  %s26 = scalar_select 0, %s25, %s23
  $region1: #{encoder_forward.1} parent=0
    #allocation3 [shape = 'u8[8192]{0}', space=vmem, size = 0x2000, scoped, tag = 'output window, operand 0, single buffered']
    #allocation4 [shape = 's32[1]{0}', space=sflag, size = 0x4, scoped, tag = 'scoped memory for encoder_forward.1']
    %27 = vsyncpa [#allocation4], 0
    // Predicated region
    $region2: #{encoder_forward.1} parent=1 // pred_check
      _
    $region3: #{encoder_forward.1} parent=1 // pred_check_branch
      %29 = sbr.rel (0) target = $region5
    $region4: #{encoder_forward.1} parent=1 // pred_region
      _
    $region5: #{encoder_forward.1} parent=1 // pred_fallthru
      _
    // Predicated region
    $region6: #{encoder_forward.1} parent=1 // pred_check
      _
    $region7: #{encoder_forward.1} parent=1 // pred_check_branch
      %31 = sbr.rel (0) target = $region9
    $region8: #{encoder_forward.1} parent=1 // pred_region
      _
    $region9: #{encoder_forward.1} parent=1 // pred_fallthru
      _
    // Predicated region
    $region10: #{encoder_forward.1} parent=1 // pred_check
      _
    $region11: #{encoder_forward.1} parent=1 // pred_check_branch
      %33 = sbr.rel (0) target = $region13
    $region12: #{encoder_forward.1} parent=1 // pred_region
      _
    $region13: #{encoder_forward.1} parent=1 // pred_fallthru
      _
    // Predicated region
    $region14: #{encoder_forward.1} parent=1 // pred_check
      _
    $region15: #{encoder_forward.1} parent=1 // pred_check_branch
      %35 = sbr.rel (0) target = $region17
    $region16: #{encoder_forward.1} parent=1 // pred_region
      _
    $region17: #{encoder_forward.1} parent=1 // pred_fallthru
      _
    // Predicated region
    $region18: #{encoder_forward.1} parent=1 // pred_check
      _
    $region19: #{encoder_forward.1} parent=1 // pred_check_branch
      %37 = sbr.rel (0) target = $region21
    $region20: #{encoder_forward.1} parent=1 // pred_region
      _
    $region21: #{encoder_forward.1} parent=1 // pred_fallthru
      _
    // Predicated region
    $region22: #{encoder_forward.1} parent=1 // pred_check
      _
    $region23: #{encoder_forward.1} parent=1 // pred_check_branch
      %39 = sbr.rel (0) target = $region25
    $region24: #{encoder_forward.1} parent=1 // pred_region
      _
    $region25: #{encoder_forward.1} parent=1 // pred_fallthru
      _
    // Predicated region
    $region26: #{encoder_forward.1} parent=1 // pred_check
      _
    $region27: #{encoder_forward.1} parent=1 // pred_check_branch
      %41 = sbr.rel (0) target = $region29
    $region28: #{encoder_forward.1} parent=1 // pred_region
      _
    $region29: #{encoder_forward.1} parent=1 // pred_fallthru
      _
    // Predicated region
    $region30: #{encoder_forward.1} parent=1 // pred_check
      _
    $region31: #{encoder_forward.1} parent=1 // pred_check_branch
      %43 = sbr.rel (0) target = $region33
    $region32: #{encoder_forward.1} parent=1 // pred_region
      _
    $region33: #{encoder_forward.1} parent=1 // pred_fallthru
      _
    // Predicated region
    $region34: #{encoder_forward.1} parent=1 // pred_check
      _
    $region35: #{encoder_forward.1} parent=1 // pred_check_branch
      %45 = sbr.rel (0) target = $region37
    $region36: #{encoder_forward.1} parent=1 // pred_region
      _
    $region37: #{encoder_forward.1} parent=1 // pred_fallthru
      _
    // Predicated region
    $region38: #{encoder_forward.1} parent=1 // pred_check
      _
    $region39: #{encoder_forward.1} parent=1 // pred_check_branch
      %47 = sbr.rel (0) target = $region41
    $region40: #{encoder_forward.1} parent=1 // pred_region
      _
    $region41: #{encoder_forward.1} parent=1 // pred_fallthru
      _
    // Predicated region
    $region42: #{encoder_forward.1} parent=1 // pred_check
      _
    $region43: #{encoder_forward.1} parent=1 // pred_check_branch
      %49 = sbr.rel (0) target = $region45
    $region44: #{encoder_forward.1} parent=1 // pred_region
      _
    $region45: #{encoder_forward.1} parent=1 // pred_fallthru
      _
    // Predicated region
    $region46: #{encoder_forward.1} parent=1 // pred_check
      _
    $region47: #{encoder_forward.1} parent=1 // pred_check_branch
      %51 = sbr.rel (0) target = $region49
    $region48: #{encoder_forward.1} parent=1 // pred_region
      _
    $region49: #{encoder_forward.1} parent=1 // pred_fallthru
      _
    // Predicated region
    $region50: #{encoder_forward.1} parent=1 // pred_check
      _
    $region51: #{encoder_forward.1} parent=1 // pred_check_branch
      %53 = sbr.rel (0) target = $region53
    $region52: #{encoder_forward.1} parent=1 // pred_region
      _
    $region53: #{encoder_forward.1} parent=1 // pred_fallthru
      _
    // Predicated region
    $region54: #{encoder_forward.1} parent=1 // pred_check
      _
    $region55: #{encoder_forward.1} parent=1 // pred_check_branch
      %55 = sbr.rel (0) target = $region57
    $region56: #{encoder_forward.1} parent=1 // pred_region
      _
    $region57: #{encoder_forward.1} parent=1 // pred_fallthru
      _
    // Predicated region
    $region58: #{encoder_forward.1} parent=1 // pred_check
      _
    $region59: #{encoder_forward.1} parent=1 // pred_check_branch
      %57 = sbr.rel (0) target = $region61
    $region60: #{encoder_forward.1} parent=1 // pred_region
      _
    $region61: #{encoder_forward.1} parent=1 // pred_fallthru
      _
    // Predicated region
    $region62: #{encoder_forward.1} parent=1 // pred_check
      _
    $region63: #{encoder_forward.1} parent=1 // pred_check_branch
      %59 = sbr.rel (0) target = $region65
    $region64: #{encoder_forward.1} parent=1 // pred_region
      _
    $region65: #{encoder_forward.1} parent=1 // pred_fallthru
      _
    // Predicated region
    $region66: #{encoder_forward.1} parent=1 // pred_check
      _
    $region67: #{encoder_forward.1} parent=1 // pred_check_branch
      %61 = sbr.rel (0) target = $region69
    $region68: #{encoder_forward.1} parent=1 // pred_region
      _
    $region69: #{encoder_forward.1} parent=1 // pred_fallthru
      _
    // Predicated region
    $region70: #{encoder_forward.1} parent=1 // pred_check
      _
    $region71: #{encoder_forward.1} parent=1 // pred_check_branch
      %63 = sbr.rel (0) target = $region73
    $region72: #{encoder_forward.1} parent=1 // pred_region
      _
    $region73: #{encoder_forward.1} parent=1 // pred_fallthru
      _
    // Predicated region
    $region74: #{encoder_forward.1} parent=1 // pred_check
      _
    $region75: #{encoder_forward.1} parent=1 // pred_check_branch
      %65 = sbr.rel (0) target = $region77
    $region76: #{encoder_forward.1} parent=1 // pred_region
      _
    $region77: #{encoder_forward.1} parent=1 // pred_fallthru
      _
    // Predicated region
    $region78: #{encoder_forward.1} parent=1 // pred_check
      _
    $region79: #{encoder_forward.1} parent=1 // pred_check_branch
      %67 = sbr.rel (0) target = $region81
    $region80: #{encoder_forward.1} parent=1 // pred_region
      _
    $region81: #{encoder_forward.1} parent=1 // pred_fallthru
      _
    // Predicated region
    $region82: #{encoder_forward.1} parent=1 // pred_check
      _
    $region83: #{encoder_forward.1} parent=1 // pred_check_branch
      %69 = sbr.rel (0) target = $region85
    $region84: #{encoder_forward.1} parent=1 // pred_region
      _
    $region85: #{encoder_forward.1} parent=1 // pred_fallthru
      _
    // Predicated region
    $region86: #{encoder_forward.1} parent=1 // pred_check
      _
    $region87: #{encoder_forward.1} parent=1 // pred_check_branch
      %71 = sbr.rel (0) target = $region89
    $region88: #{encoder_forward.1} parent=1 // pred_region
      _
    $region89: #{encoder_forward.1} parent=1 // pred_fallthru
      _
    %v73 = vld [vmem:[%s1] sm:$0x3]
    %v74 = vld [vmem:[%s1 + $0x2] sm:$0x3]
    %v75 = vunpack.c.0.s8 %v73
    %v76 = vunpack.c.0.s8 %v74
    %v77 = vcvt.s32.f32 %v75
    %v78 = vcvt.s32.f32 %v76
    %vm79 = vcmp.gt.f32.partialorder %v77, 0.0
    %vm80 = vcmp.gt.f32.partialorder %v78, 0.0
    %v81 = vld [vmem:[%s0] sm:$0xff]
    %v82 = vld [vmem:[%s0 + $0x8] sm:$0xff]
    %v83 = vld [vmem:[%s2] sm:$0xf]
    %v84 = vld [vmem:[%s2 + $0x4] sm:$0xf]
    %v85 = vld [vmem:[%s2 + $0x8] sm:$0xf]
    %v86 = vld [vmem:[%s2 + $0xc] sm:$0xf]
    %v87 = vld [vmem:[%s2 + $0x10] sm:$0xf]
    %v88 = vld [vmem:[%s2 + $0x14] sm:$0xf]
    %v89 = vld [vmem:[%s2 + $0x18] sm:$0xf]
    %v90 = vld [vmem:[%s2 + $0x1c] sm:$0xf]
    %v91 = vld [vmem:[%s2 + $0x20] sm:$0xf]
    %v92 = vld [vmem:[%s2 + $0x24] sm:$0xf]
    %v93 = vld [vmem:[%s2 + $0x28] sm:$0xf]
    %v94 = vld [vmem:[%s2 + $0x2c] sm:$0xf]
    %v95 = vld [vmem:[%s2 + $0x30] sm:$0xf]
    %v96 = vld [vmem:[%s2 + $0x34] sm:$0xf]
    %v97 = vld [vmem:[%s2 + $0x38] sm:$0xf]
    %v98 = vld [vmem:[%s2 + $0x3c] sm:$0xf]
    %v99 = vld [vmem:[%s3] sm:$0x1]
    %v100 = vld [vmem:[%s4] sm:$0xf]
    %v101 = vld [vmem:[%s4 + $0x4] sm:$0xf]
    %v102 = vld [vmem:[%s4 + $0x8] sm:$0xf]
    %v103 = vld [vmem:[%s4 + $0xc] sm:$0xf]
    %v104 = vld [vmem:[%s4 + $0x10] sm:$0xf]
    %v105 = vld [vmem:[%s4 + $0x14] sm:$0xf]
    %v106 = vld [vmem:[%s4 + $0x18] sm:$0xf]
    %v107 = vld [vmem:[%s4 + $0x1c] sm:$0xf]
    %v108 = vld [vmem:[%s4 + $0x20] sm:$0xf]
    %v109 = vld [vmem:[%s4 + $0x24] sm:$0xf]
    %v110 = vld [vmem:[%s4 + $0x28] sm:$0xf]
    %v111 = vld [vmem:[%s4 + $0x2c] sm:$0xf]
    %v112 = vld [vmem:[%s4 + $0x30] sm:$0xf]
    %v113 = vld [vmem:[%s4 + $0x34] sm:$0xf]
    %v114 = vld [vmem:[%s4 + $0x38] sm:$0xf]
    %v115 = vld [vmem:[%s4 + $0x3c] sm:$0xf]
    %v116 = vld [vmem:[%s5] sm:$0x1]
    %v117 = vld [vmem:[%s6] sm:$0x1]
    %v118 = vld [vmem:[%s7] sm:$0x1]
    %v119 = vld [vmem:[%s8] sm:$0xf]
    %v120 = vld [vmem:[%s8 + $0x4] sm:$0xf]
    %v121 = vld [vmem:[%s8 + $0x8] sm:$0xf]
    %v122 = vld [vmem:[%s8 + $0xc] sm:$0xf]
    %v123 = vld [vmem:[%s8 + $0x10] sm:$0xf]
    %v124 = vld [vmem:[%s8 + $0x14] sm:$0xf]
    %v125 = vld [vmem:[%s8 + $0x18] sm:$0xf]
    %v126 = vld [vmem:[%s8 + $0x1c] sm:$0xf]
    %v127 = vld [vmem:[%s8 + $0x20] sm:$0xf]
    %v128 = vld [vmem:[%s8 + $0x24] sm:$0xf]
    %v129 = vld [vmem:[%s8 + $0x28] sm:$0xf]
    %v130 = vld [vmem:[%s8 + $0x2c] sm:$0xf]
    %v131 = vld [vmem:[%s8 + $0x30] sm:$0xf]
    %v132 = vld [vmem:[%s8 + $0x34] sm:$0xf]
    %v133 = vld [vmem:[%s8 + $0x38] sm:$0xf]
    %v134 = vld [vmem:[%s8 + $0x3c] sm:$0xf]
    %v135 = vld [vmem:[%s9] sm:$0x1]
    %v136 = vld [vmem:[%s10] sm:$0x1]
    %v137 = vld [vmem:[%s11] sm:$0x1]
    %v138 = vpack.c.bf16 %v82, %v81
    %v140 = vperm.slane %v99, 0
    %v158 = vunpack.c.l.b16 %v83
    %v159 = vunpack.c.l.b16 %v84
    %v160 = vunpack.c.l.b16 %v85
    %v161 = vunpack.c.l.b16 %v86
    %v162 = vunpack.c.l.b16 %v87
    %v163 = vunpack.c.l.b16 %v88
    %v164 = vunpack.c.l.b16 %v89
    %v165 = vunpack.c.l.b16 %v90
    %v166 = vunpack.c.l.b16 %v91
    %v167 = vunpack.c.l.b16 %v92
    %v168 = vunpack.c.l.b16 %v93
    %v169 = vunpack.c.l.b16 %v94
    %v170 = vunpack.c.l.b16 %v95
    %v171 = vunpack.c.l.b16 %v96
    %v172 = vunpack.c.l.b16 %v97
    %v173 = vunpack.c.l.b16 %v98
    %v174 = vpack.c.b16 %v159, %v158
    %v175 = vpack.c.b16 %v161, %v160
    %v176 = vpack.c.b16 %v163, %v162
    %v177 = vpack.c.b16 %v165, %v164
    %v178 = vpack.c.b16 %v167, %v166
    %v179 = vpack.c.b16 %v169, %v168
    %v180 = vpack.c.b16 %v171, %v170
    %v181 = vpack.c.b16 %v173, %v172
    %190 = vmatpush.bf16.msra.mxu0 %v181
    %191 = vmatpush.bf16.msra.mxu0 %v180
    %192 = vmatpush.bf16.msra.mxu0 %v179
    %193 = vmatpush.bf16.msra.mxu0 %v178
    %194 = vmatpush.bf16.msra.mxu0 %v177
    %195 = vmatpush.bf16.msra.mxu0 %v176
    %196 = vmatpush.bf16.msra.mxu0 %v175
    %197 = vmatpush.bf16.msra.mxu0 %v174
    %198 = vmatmul.bf16.gmra.mxu0 %v138
    %v199 = vpop.f32.mrf.mxu0
    %v200 = vadd.f32 %v140, %v199
    %v201 = vpop.f32.mrf.mxu0
    %v202 = vadd.f32 %v140, %v201
    %203 = vdwg.mxu0
    %v205 = vperm.slane %v116, 0
    %v223 = vunpack.c.l.b16 %v100
    %v224 = vunpack.c.l.b16 %v101
    %v225 = vunpack.c.l.b16 %v102
    %v226 = vunpack.c.l.b16 %v103
    %v227 = vunpack.c.l.b16 %v104
    %v228 = vunpack.c.l.b16 %v105
    %v229 = vunpack.c.l.b16 %v106
    %v230 = vunpack.c.l.b16 %v107
    %v231 = vunpack.c.l.b16 %v108
    %v232 = vunpack.c.l.b16 %v109
    %v233 = vunpack.c.l.b16 %v110
    %v234 = vunpack.c.l.b16 %v111
    %v235 = vunpack.c.l.b16 %v112
    %v236 = vunpack.c.l.b16 %v113
    %v237 = vunpack.c.l.b16 %v114
    %v238 = vunpack.c.l.b16 %v115
    %v239 = vpack.c.b16 %v224, %v223
    %v240 = vpack.c.b16 %v226, %v225
    %v241 = vpack.c.b16 %v228, %v227
    %v242 = vpack.c.b16 %v230, %v229
    %v243 = vpack.c.b16 %v232, %v231
    %v244 = vpack.c.b16 %v234, %v233
    %v245 = vpack.c.b16 %v236, %v235
    %v246 = vpack.c.b16 %v238, %v237
    %255 = vmatpush.bf16.msra.mxu0 %v246
    %256 = vmatpush.bf16.msra.mxu0 %v245
    %257 = vmatpush.bf16.msra.mxu0 %v244
    %258 = vmatpush.bf16.msra.mxu0 %v243
    %259 = vmatpush.bf16.msra.mxu0 %v242
    %260 = vmatpush.bf16.msra.mxu0 %v241
    %261 = vmatpush.bf16.msra.mxu0 %v240
    %262 = vmatpush.bf16.msra.mxu0 %v239
    %263 = vmatmul.bf16.gmra.mxu0 %v138
    %v264 = vpop.f32.mrf.mxu0
    %v265 = vadd.f32 %v205, %v264
    %v266 = vpop.f32.mrf.mxu0
    %v267 = vadd.f32 %v205, %v266
    %268 = vdwg.mxu0
    %v269 = vpack.c.bf16 %v202, %v200
    %v271 = vperm.slane %v117, 0
    %v273 = vmul.f32 %v265, %v271
    %v274 = vmul.f32 %v267, %v271
    %275 = vadd.xlane.f32.xlu0 %v273
    %v276 = vpop.xlane.xlu0 %275
    %277 = vadd.xlane.f32.xlu0 %v274
    %v278 = vpop.xlane.xlu0 %277
    %279 = vmatpush.xpose.msra.mxu0 0.0
    %280 = vmatpush.xpose.msra.mxu0 0.0
    %281 = vmatpush.xpose.msra.mxu0 0.0
    %282 = vmatpush.xpose.msra.mxu0 0.0
    %283 = vmatpush.xpose.msra.mxu0 0.0
    %284 = vmatpush.xpose.msra.mxu0 0.0
    %285 = vmatpush.xpose.msra.mxu0 0.0
    %286 = vmatpush.xpose.msra.mxu0 0.0
    %287 = vmatpush.xpose.msra.mxu0 0.0
    %288 = vmatpush.xpose.msra.mxu0 0.0
    %289 = vmatpush.xpose.msra.mxu0 0.0
    %290 = vmatpush.xpose.msra.mxu0 0.0
    %291 = vmatpush.xpose.msra.mxu0 0.0
    %292 = vmatpush.xpose.msra.mxu0 0.0
    %293 = vmatpush.xpose.msra.mxu0 %v202
    %294 = vmatpush.xpose.msra.mxu0 %v200
    %295 = vmatmul.f32.gmra.mxu0 %v271
    %v296 = vpop.f32.mrf.mxu0
    %v297 = vadd.f32 0.0, %v296
    %298 = vdwg.mxu0
    %v301 = vrot.slane %v265, 1
    %v302 = vrot.slane %v265, 2
    %v303 = vrot.slane %v265, 3
    %v304 = vrot.slane %v265, 4
    %v305 = vrot.slane %v265, 5
    %v306 = vrot.slane %v265, 6
    %v307 = vrot.slane %v265, 7
    %v308 = vrot.slane %v267, 1
    %v309 = vrot.slane %v267, 2
    %v310 = vrot.slane %v267, 3
    %v311 = vrot.slane %v267, 4
    %v312 = vrot.slane %v267, 5
    %v313 = vrot.slane %v267, 6
    %v314 = vrot.slane %v267, 7
    %v315 = vperm.slane %v265, 0
    %v316 = vperm.slane %v301, 0
    %v317 = vperm.slane %v302, 0
    %v318 = vperm.slane %v303, 0
    %v319 = vperm.slane %v304, 0
    %v320 = vperm.slane %v305, 0
    %v321 = vperm.slane %v306, 0
    %v322 = vperm.slane %v307, 0
    %v323 = vperm.slane %v267, 0
    %v324 = vperm.slane %v308, 0
    %v325 = vperm.slane %v309, 0
    %v326 = vperm.slane %v310, 0
    %v327 = vperm.slane %v311, 0
    %v328 = vperm.slane %v312, 0
    %v329 = vperm.slane %v313, 0
    %v330 = vperm.slane %v314, 0
    %v347 = vadd.f32 %v200, %v315
    %v348 = vadd.f32 %v202, %v315
    %v349 = vadd.f32 %v200, %v316
    %v350 = vadd.f32 %v202, %v316
    %v351 = vadd.f32 %v200, %v317
    %v352 = vadd.f32 %v202, %v317
    %v353 = vadd.f32 %v200, %v318
    %v354 = vadd.f32 %v202, %v318
    %v355 = vadd.f32 %v200, %v319
    %v356 = vadd.f32 %v202, %v319
    %v357 = vadd.f32 %v200, %v320
    %v358 = vadd.f32 %v202, %v320
    %v359 = vadd.f32 %v200, %v321
    %v360 = vadd.f32 %v202, %v321
    %v361 = vadd.f32 %v200, %v322
    %v362 = vadd.f32 %v202, %v322
    %v363 = vadd.f32 %v200, %v323
    %v364 = vadd.f32 %v202, %v323
    %v365 = vadd.f32 %v200, %v324
    %v366 = vadd.f32 %v202, %v324
    %v367 = vadd.f32 %v200, %v325
    %v368 = vadd.f32 %v202, %v325
    %v369 = vadd.f32 %v200, %v326
    %v370 = vadd.f32 %v202, %v326
    %v371 = vadd.f32 %v200, %v327
    %v372 = vadd.f32 %v202, %v327
    %v373 = vadd.f32 %v200, %v328
    %v374 = vadd.f32 %v202, %v328
    %v375 = vadd.f32 %v200, %v329
    %v376 = vadd.f32 %v202, %v329
    %v377 = vadd.f32 %v200, %v330
    %v378 = vadd.f32 %v202, %v330
    %v379 = vand.u32 2147483647, %v347
    %v380 = vand.u32 2147483647, %v348
    %v381 = vand.u32 2147483647, %v349
    %v382 = vand.u32 2147483647, %v350
    %v383 = vand.u32 2147483647, %v351
    %v384 = vand.u32 2147483647, %v352
    %v385 = vand.u32 2147483647, %v353
    %v386 = vand.u32 2147483647, %v354
    %v387 = vand.u32 2147483647, %v355
    %v388 = vand.u32 2147483647, %v356
    %v389 = vand.u32 2147483647, %v357
    %v390 = vand.u32 2147483647, %v358
    %v391 = vand.u32 2147483647, %v359
    %v392 = vand.u32 2147483647, %v360
    %v393 = vand.u32 2147483647, %v361
    %v394 = vand.u32 2147483647, %v362
    %v395 = vand.u32 2147483647, %v363
    %v396 = vand.u32 2147483647, %v364
    %v397 = vand.u32 2147483647, %v365
    %v398 = vand.u32 2147483647, %v366
    %v399 = vand.u32 2147483647, %v367
    %v400 = vand.u32 2147483647, %v368
    %v401 = vand.u32 2147483647, %v369
    %v402 = vand.u32 2147483647, %v370
    %v403 = vand.u32 2147483647, %v371
    %v404 = vand.u32 2147483647, %v372
    %v405 = vand.u32 2147483647, %v373
    %v406 = vand.u32 2147483647, %v374
    %v407 = vand.u32 2147483647, %v375
    %v408 = vand.u32 2147483647, %v376
    %v409 = vand.u32 2147483647, %v377
    %v410 = vand.u32 2147483647, %v378
    %v411 = vperm.slane %v297, 0
    %v412 = vadd.f32 %v276, %v411
    %v413 = vadd.f32 %v278, %v411
    %v414 = vmul.f32 %v412, 0.6
    %v415 = vmul.f32 %v413, 0.6
    %v416 = vmul.f32 %v379, %v271
    %v417 = vmul.f32 %v380, %v271
    %v418 = vmul.f32 %v381, %v271
    %v419 = vmul.f32 %v382, %v271
    %v420 = vmul.f32 %v383, %v271
    %v421 = vmul.f32 %v384, %v271
    %v422 = vmul.f32 %v385, %v271
    %v423 = vmul.f32 %v386, %v271
    %v424 = vmul.f32 %v387, %v271
    %v425 = vmul.f32 %v388, %v271
    %v426 = vmul.f32 %v389, %v271
    %v427 = vmul.f32 %v390, %v271
    %v428 = vmul.f32 %v391, %v271
    %v429 = vmul.f32 %v392, %v271
    %v430 = vmul.f32 %v393, %v271
    %v431 = vmul.f32 %v394, %v271
    %v432 = vmul.f32 %v395, %v271
    %v433 = vmul.f32 %v396, %v271
    %v434 = vmul.f32 %v397, %v271
    %v435 = vmul.f32 %v398, %v271
    %v436 = vmul.f32 %v399, %v271
    %v437 = vmul.f32 %v400, %v271
    %v438 = vmul.f32 %v401, %v271
    %v439 = vmul.f32 %v402, %v271
    %v440 = vmul.f32 %v403, %v271
    %v441 = vmul.f32 %v404, %v271
    %v442 = vmul.f32 %v405, %v271
    %v443 = vmul.f32 %v406, %v271
    %v444 = vmul.f32 %v407, %v271
    %v445 = vmul.f32 %v408, %v271
    %v446 = vmul.f32 %v409, %v271
    %v447 = vmul.f32 %v410, %v271
    %448 = vadd.xlane.f32.xlu0 %v416
    %v449 = vpop.xlane.xlu0 %448
    %450 = vadd.xlane.f32.xlu0 %v417
    %v451 = vpop.xlane.xlu0 %450
    %452 = vadd.xlane.f32.xlu0 %v418
    %v453 = vpop.xlane.xlu0 %452
    %454 = vadd.xlane.f32.xlu0 %v419
    %v455 = vpop.xlane.xlu0 %454
    %456 = vadd.xlane.f32.xlu0 %v420
    %v457 = vpop.xlane.xlu0 %456
    %458 = vadd.xlane.f32.xlu0 %v421
    %v459 = vpop.xlane.xlu0 %458
    %460 = vadd.xlane.f32.xlu0 %v422
    %v461 = vpop.xlane.xlu0 %460
    %462 = vadd.xlane.f32.xlu0 %v423
    %v463 = vpop.xlane.xlu0 %462
    %464 = vadd.xlane.f32.xlu0 %v424
    %v465 = vpop.xlane.xlu0 %464
    %466 = vadd.xlane.f32.xlu0 %v425
    %v467 = vpop.xlane.xlu0 %466
    %468 = vadd.xlane.f32.xlu0 %v426
    %v469 = vpop.xlane.xlu0 %468
    %470 = vadd.xlane.f32.xlu0 %v427
    %v471 = vpop.xlane.xlu0 %470
    %472 = vadd.xlane.f32.xlu0 %v428
    %v473 = vpop.xlane.xlu0 %472
    %474 = vadd.xlane.f32.xlu0 %v429
    %v475 = vpop.xlane.xlu0 %474
    %476 = vadd.xlane.f32.xlu0 %v430
    %v477 = vpop.xlane.xlu0 %476
    %478 = vadd.xlane.f32.xlu0 %v431
    %v479 = vpop.xlane.xlu0 %478
    %480 = vadd.xlane.f32.xlu0 %v432
    %v481 = vpop.xlane.xlu0 %480
    %482 = vadd.xlane.f32.xlu0 %v433
    %v483 = vpop.xlane.xlu0 %482
    %484 = vadd.xlane.f32.xlu0 %v434
    %v485 = vpop.xlane.xlu0 %484
    %486 = vadd.xlane.f32.xlu0 %v435
    %v487 = vpop.xlane.xlu0 %486
    %488 = vadd.xlane.f32.xlu0 %v436
    %v489 = vpop.xlane.xlu0 %488
    %490 = vadd.xlane.f32.xlu0 %v437
    %v491 = vpop.xlane.xlu0 %490
    %492 = vadd.xlane.f32.xlu0 %v438
    %v493 = vpop.xlane.xlu0 %492
    %494 = vadd.xlane.f32.xlu0 %v439
    %v495 = vpop.xlane.xlu0 %494
    %496 = vadd.xlane.f32.xlu0 %v440
    %v497 = vpop.xlane.xlu0 %496
    %498 = vadd.xlane.f32.xlu0 %v441
    %v499 = vpop.xlane.xlu0 %498
    %500 = vadd.xlane.f32.xlu0 %v442
    %v501 = vpop.xlane.xlu0 %500
    %502 = vadd.xlane.f32.xlu0 %v443
    %v503 = vpop.xlane.xlu0 %502
    %504 = vadd.xlane.f32.xlu0 %v444
    %v505 = vpop.xlane.xlu0 %504
    %506 = vadd.xlane.f32.xlu0 %v445
    %v507 = vpop.xlane.xlu0 %506
    %508 = vadd.xlane.f32.xlu0 %v446
    %v509 = vpop.xlane.xlu0 %508
    %510 = vadd.xlane.f32.xlu0 %v447
    %v511 = vpop.xlane.xlu0 %510
    %v512 = vmul.f32 %v449, 0.4
    %v513 = vmul.f32 %v451, 0.4
    %v514 = vmul.f32 %v453, 0.4
    %v515 = vmul.f32 %v455, 0.4
    %v516 = vmul.f32 %v457, 0.4
    %v517 = vmul.f32 %v459, 0.4
    %v518 = vmul.f32 %v461, 0.4
    %v519 = vmul.f32 %v463, 0.4
    %v520 = vmul.f32 %v465, 0.4
    %v521 = vmul.f32 %v467, 0.4
    %v522 = vmul.f32 %v469, 0.4
    %v523 = vmul.f32 %v471, 0.4
    %v524 = vmul.f32 %v473, 0.4
    %v525 = vmul.f32 %v475, 0.4
    %v526 = vmul.f32 %v477, 0.4
    %v527 = vmul.f32 %v479, 0.4
    %v528 = vmul.f32 %v481, 0.4
    %v529 = vmul.f32 %v483, 0.4
    %v530 = vmul.f32 %v485, 0.4
    %v531 = vmul.f32 %v487, 0.4
    %v532 = vmul.f32 %v489, 0.4
    %v533 = vmul.f32 %v491, 0.4
    %v534 = vmul.f32 %v493, 0.4
    %v535 = vmul.f32 %v495, 0.4
    %v536 = vmul.f32 %v497, 0.4
    %v537 = vmul.f32 %v499, 0.4
    %v538 = vmul.f32 %v501, 0.4
    %v539 = vmul.f32 %v503, 0.4
    %v540 = vmul.f32 %v505, 0.4
    %v541 = vmul.f32 %v507, 0.4
    %v542 = vmul.f32 %v509, 0.4
    %v543 = vmul.f32 %v511, 0.4
    %v576 = vlaneseq
    %v577 = vand.u32 %v576, 127
    %v578 = vperm.slane %v512, %v577
    %v579 = vadd.s32 %v577, 4294967288
    %v580 = vperm.slane %v513, %v579
    %vm581 = vcmask 130112
    %v582 = vsel %vm581, %v580, %v578
    %v583 = vperm.slane %v514, %v577
    %v584 = vperm.slane %v515, %v579
    %v585 = vsel %vm581, %v584, %v583
    %v586 = vperm.slane %v516, %v577
    %v587 = vperm.slane %v517, %v579
    %v588 = vsel %vm581, %v587, %v586
    %v589 = vperm.slane %v518, %v577
    %v590 = vperm.slane %v519, %v579
    %v591 = vsel %vm581, %v590, %v589
    %v592 = vperm.slane %v520, %v577
    %v593 = vperm.slane %v521, %v579
    %v594 = vsel %vm581, %v593, %v592
    %v595 = vperm.slane %v522, %v577
    %v596 = vperm.slane %v523, %v579
    %v597 = vsel %vm581, %v596, %v595
    %v598 = vperm.slane %v524, %v577
    %v599 = vperm.slane %v525, %v579
    %v600 = vsel %vm581, %v599, %v598
    %v601 = vperm.slane %v526, %v577
    %v602 = vperm.slane %v527, %v579
    %v603 = vsel %vm581, %v602, %v601
    %v604 = vperm.slane %v528, %v577
    %v605 = vperm.slane %v529, %v579
    %v606 = vsel %vm581, %v605, %v604
    %v607 = vperm.slane %v530, %v577
    %v608 = vperm.slane %v531, %v579
    %v609 = vsel %vm581, %v608, %v607
    %v610 = vperm.slane %v532, %v577
    %v611 = vperm.slane %v533, %v579
    %v612 = vsel %vm581, %v611, %v610
    %v613 = vperm.slane %v534, %v577
    %v614 = vperm.slane %v535, %v579
    %v615 = vsel %vm581, %v614, %v613
    %v616 = vperm.slane %v536, %v577
    %v617 = vperm.slane %v537, %v579
    %v618 = vsel %vm581, %v617, %v616
    %v619 = vperm.slane %v538, %v577
    %v620 = vperm.slane %v539, %v579
    %v621 = vsel %vm581, %v620, %v619
    %v622 = vperm.slane %v540, %v577
    %v623 = vperm.slane %v541, %v579
    %v624 = vsel %vm581, %v623, %v622
    %v625 = vperm.slane %v542, %v577
    %v626 = vperm.slane %v543, %v579
    %v627 = vsel %vm581, %v626, %v625
    %vm628 = vcmask 1041409
    %v629 = vsel %vm628, %v585, %v582
    %vm630 = vcmask 1042434
    %v631 = vsel %vm630, %v588, %v629
    %vm632 = vcmask 1043459
    %v633 = vsel %vm632, %v591, %v631
    %vm634 = vcmask 1044484
    %v635 = vsel %vm634, %v594, %v633
    %vm636 = vcmask 1045509
    %v637 = vsel %vm636, %v597, %v635
    %vm638 = vcmask 1046534
    %v639 = vsel %vm638, %v600, %v637
    %vm640 = vcmask 1047559
    %v641 = vsel %vm640, %v603, %v639
    %v642 = vsel %vm628, %v609, %v606
    %v643 = vsel %vm630, %v612, %v642
    %v644 = vsel %vm632, %v615, %v643
    %v645 = vsel %vm634, %v618, %v644
    %v646 = vsel %vm636, %v621, %v645
    %v647 = vsel %vm638, %v624, %v646
    %v648 = vsel %vm640, %v627, %v647
    %v651 = vadd.f32 %v414, %v641
    %v652 = vadd.f32 %v415, %v648
    %v653 = vsel %vm79, %v651, -1e+30
    %v654 = vsel %vm80, %v652, -1e+30
    %vm655 = vcmask 130048
    %v656 = vsel %vm655, %v653, -inf
    %657 = vmax.xlane.f32.xlu0 %v656
    %v658 = vpop.xlane.xlu0 %657
    %v659 = vsel %vm655, %v654, -inf
    %660 = vmax.xlane.f32.xlu0 %v659
    %v661 = vpop.xlane.xlu0 %660
    %v662 = vmax.f32 %v658, -1e+30
    %v663 = vmax.f32 %v661, -1e+30
    %v664 = vsub.f32 -1e+30, %v662
    %v665 = vsub.f32 -1e+30, %v663
    %v666 = vmul.f32 %v664, 1.442695
    %v667 = vpow.pop %v666
    %v668 = vmul.f32 %v665, 1.442695
    %v669 = vpow.pop %v668
    %v670 = vsub.f32 %v653, %v662
    %v671 = vsub.f32 %v654, %v663
    %v672 = vmul.f32 %v670, 1.442695
    %v673 = vpow.pop %v672
    %v674 = vmul.f32 %v671, 1.442695
    %v675 = vpow.pop %v674
    %v676 = vmul.f32 %v77, %v673
    %v677 = vmul.f32 %v78, %v675
    %v678 = vmul.f32 %v667, 0.0
    %v679 = vmul.f32 %v669, 0.0
    %v680 = vsel %vm655, %v676, 0.0
    %681 = vadd.xlane.f32.xlu0 %v680
    %v682 = vpop.xlane.xlu0 %681
    %v683 = vsel %vm655, %v677, 0.0
    %684 = vadd.xlane.f32.xlu0 %v683
    %v685 = vpop.xlane.xlu0 %684
    %v686 = vadd.f32 %v678, %v682
    %v687 = vadd.f32 %v679, %v685
    %v688 = vpack.c.bf16 %v677, %v676
    %v690 = vsel %vm655, %v688, 0
    %692 = vmatpush.bf16.msra.mxu0 0
    %693 = vmatpush.bf16.msra.mxu0 0
    %694 = vmatpush.bf16.msra.mxu0 0
    %695 = vmatpush.bf16.msra.mxu0 0
    %696 = vmatpush.bf16.msra.mxu0 0
    %697 = vmatpush.bf16.msra.mxu0 0
    %698 = vmatpush.bf16.msra.mxu0 0
    %699 = vmatpush.bf16.msra.mxu0 %v269
    %700 = vmatmul.bf16.gmra.mxu0 %v690
    %v701 = vpop.f32.mrf.mxu0
    %v702 = vadd.f32 0.0, %v701
    %v703 = vpop.f32.mrf.mxu0
    %v704 = vadd.f32 0.0, %v703
    %705 = vdwg.mxu0
    %v706 = vadd.f32 %v678, %v702
    %v707 = vadd.f32 %v679, %v704
    %v708 = vmax.f32 %v686, 1.0
    %v709 = vmax.f32 %v687, 1.0
    %v710 = vrcp.pop %v708
    %v711 = vrcp.pop %v709
    %v712 = vmul.f32 %v706, %v710
    %v713 = vmul.f32 %v707, %v711
    %v715 = vperm.slane %v118, 0
    %v717 = vadd.f32 %v712, %v715
    %v718 = vadd.f32 %v713, %v715
    %719 = vst [vmem:[#allocation2] sm:$0xff] %v717
    %720 = vst [vmem:[#allocation2 + $0x8] sm:$0xff] %v718
    %v721 = vld [vmem:[#allocation2] sm:$0xff]
    %v722 = vld [vmem:[#allocation2 + $0x8] sm:$0xff]
    %v723 = vpack.c.bf16 %v722, %v721
    %v740 = vunpack.c.l.b16 %v119
    %v741 = vunpack.c.l.b16 %v120
    %v742 = vunpack.c.l.b16 %v121
    %v743 = vunpack.c.l.b16 %v122
    %v744 = vunpack.c.l.b16 %v123
    %v745 = vunpack.c.l.b16 %v124
    %v746 = vunpack.c.l.b16 %v125
    %v747 = vunpack.c.l.b16 %v126
    %v748 = vunpack.c.l.b16 %v127
    %v749 = vunpack.c.l.b16 %v128
    %v750 = vunpack.c.l.b16 %v129
    %v751 = vunpack.c.l.b16 %v130
    %v752 = vunpack.c.l.b16 %v131
    %v753 = vunpack.c.l.b16 %v132
    %v754 = vunpack.c.l.b16 %v133
    %v755 = vunpack.c.l.b16 %v134
    %v756 = vpack.c.b16 %v741, %v740
    %v757 = vpack.c.b16 %v743, %v742
    %v758 = vpack.c.b16 %v745, %v744
    %v759 = vpack.c.b16 %v747, %v746
    %v760 = vpack.c.b16 %v749, %v748
    %v761 = vpack.c.b16 %v751, %v750
    %v762 = vpack.c.b16 %v753, %v752
    %v763 = vpack.c.b16 %v755, %v754
    %772 = vmatpush.bf16.msra.mxu0 %v763
    %773 = vmatpush.bf16.msra.mxu0 %v762
    %774 = vmatpush.bf16.msra.mxu0 %v761
    %775 = vmatpush.bf16.msra.mxu0 %v760
    %776 = vmatpush.bf16.msra.mxu0 %v759
    %777 = vmatpush.bf16.msra.mxu0 %v758
    %778 = vmatpush.bf16.msra.mxu0 %v757
    %779 = vmatpush.bf16.msra.mxu0 %v756
    %780 = vmatmul.bf16.gmra.mxu0 %v723
    %v781 = vpop.f32.mrf.mxu0
    %v782 = vadd.f32 0.0, %v781
    %v783 = vpop.f32.mrf.mxu0
    %v784 = vadd.f32 0.0, %v783
    %785 = vdwg.mxu0
    %v786 = vadd.f32 %v721, %v782
    %v787 = vadd.f32 %v722, %v784
    %v789 = vperm.slane %v135, 0
    %v791 = vadd.f32 %v786, %v789
    %v792 = vadd.f32 %v787, %v789
    %v793 = vadd.f32 %v791, %v792
    %v794 = vrot.slane %v793, 4
    %v795 = vadd.f32 %v793, %v794
    %v796 = vrot.slane %v795, 2
    %v797 = vadd.f32 %v795, %v796
    %v798 = vrot.slane %v797, 1
    %v799 = vadd.f32 %v797, %v798
    %v800 = vrcp.pop 16.0
    %v801 = vmul.f32 16.0, %v800
    %v802 = vsub.f32 1.0, %v801
    %v803 = vmul.f32 %v800, %v802
    %v804 = vadd.f32 %v800, %v803
    %vm805 = vweird.f32 %v800
    %v806 = vsel %vm805, %v800, %v804
    %v807 = vmul.f32 %v799, %v806
    %v808 = vsub.f32 %v791, %v807
    %v809 = vsub.f32 %v792, %v807
    %v810 = vmul.f32 %v808, %v808
    %v811 = vmul.f32 %v809, %v809
    %v812 = vadd.f32 %v810, %v811
    %v813 = vrot.slane %v812, 4
    %v814 = vadd.f32 %v812, %v813
    %v815 = vrot.slane %v814, 2
    %v816 = vadd.f32 %v814, %v815
    %v817 = vrot.slane %v816, 1
    %v818 = vadd.f32 %v816, %v817
    %v819 = vmul.f32 %v818, %v806
    %v820 = vadd.f32 %v819, 1e-05
    %v821 = vrsqrt.pop %v820
    %v822 = vmul.f32 %v821, %v820
    %v823 = vmul.f32 %v822, %v821
    %v824 = vmul.f32 0.5, %v823
    %v825 = vsub.f32 1.5, %v824
    %v826 = vmul.f32 %v821, %v825
    %vm827 = vweird.f32 %v820
    %vm828 = vweird.f32 %v821
    %vm829 = vmor %vm827, %vm828
    %v830 = vsel %vm829, %v821, %v826
    %v831 = vmul.f32 %v808, %v830
    %v832 = vmul.f32 %v809, %v830
    %v834 = vperm.slane %v136, 0
    %v836 = vmul.f32 %v831, %v834
    %v837 = vmul.f32 %v832, %v834
    %v839 = vperm.slane %v137, 0
    %v841 = vadd.f32 %v836, %v839
    %v842 = vadd.f32 %v837, %v839
    %v843 = vmax.f32 %v841, 0.0
    %v844 = vmax.f32 %v842, 0.0
    %v845 = vld [vmem:[%s12] sm:$0xf]
    %v846 = vld [vmem:[%s12 + $0x4] sm:$0xf]
    %v847 = vld [vmem:[%s12 + $0x8] sm:$0xf]
    %v848 = vld [vmem:[%s12 + $0xc] sm:$0xf]
    %v849 = vld [vmem:[%s12 + $0x10] sm:$0xf]
    %v850 = vld [vmem:[%s12 + $0x14] sm:$0xf]
    %v851 = vld [vmem:[%s12 + $0x18] sm:$0xf]
    %v852 = vld [vmem:[%s12 + $0x1c] sm:$0xf]
    %v853 = vld [vmem:[%s12 + $0x20] sm:$0xf]
    %v854 = vld [vmem:[%s12 + $0x24] sm:$0xf]
    %v855 = vld [vmem:[%s12 + $0x28] sm:$0xf]
    %v856 = vld [vmem:[%s12 + $0x2c] sm:$0xf]
    %v857 = vld [vmem:[%s12 + $0x30] sm:$0xf]
    %v858 = vld [vmem:[%s12 + $0x34] sm:$0xf]
    %v859 = vld [vmem:[%s12 + $0x38] sm:$0xf]
    %v860 = vld [vmem:[%s12 + $0x3c] sm:$0xf]
    %v861 = vld [vmem:[%s13] sm:$0x1]
    %v862 = vld [vmem:[%s14] sm:$0xf]
    %v863 = vld [vmem:[%s14 + $0x4] sm:$0xf]
    %v864 = vld [vmem:[%s14 + $0x8] sm:$0xf]
    %v865 = vld [vmem:[%s14 + $0xc] sm:$0xf]
    %v866 = vld [vmem:[%s14 + $0x10] sm:$0xf]
    %v867 = vld [vmem:[%s14 + $0x14] sm:$0xf]
    %v868 = vld [vmem:[%s14 + $0x18] sm:$0xf]
    %v869 = vld [vmem:[%s14 + $0x1c] sm:$0xf]
    %v870 = vld [vmem:[%s14 + $0x20] sm:$0xf]
    %v871 = vld [vmem:[%s14 + $0x24] sm:$0xf]
    %v872 = vld [vmem:[%s14 + $0x28] sm:$0xf]
    %v873 = vld [vmem:[%s14 + $0x2c] sm:$0xf]
    %v874 = vld [vmem:[%s14 + $0x30] sm:$0xf]
    %v875 = vld [vmem:[%s14 + $0x34] sm:$0xf]
    %v876 = vld [vmem:[%s14 + $0x38] sm:$0xf]
    %v877 = vld [vmem:[%s14 + $0x3c] sm:$0xf]
    %v878 = vld [vmem:[%s15] sm:$0x1]
    %v879 = vld [vmem:[%s16] sm:$0x1]
    %v880 = vld [vmem:[%s17] sm:$0x1]
    %v881 = vld [vmem:[%s18] sm:$0xf]
    %v882 = vld [vmem:[%s18 + $0x4] sm:$0xf]
    %v883 = vld [vmem:[%s18 + $0x8] sm:$0xf]
    %v884 = vld [vmem:[%s18 + $0xc] sm:$0xf]
    %v885 = vld [vmem:[%s18 + $0x10] sm:$0xf]
    %v886 = vld [vmem:[%s18 + $0x14] sm:$0xf]
    %v887 = vld [vmem:[%s18 + $0x18] sm:$0xf]
    %v888 = vld [vmem:[%s18 + $0x1c] sm:$0xf]
    %v889 = vld [vmem:[%s18 + $0x20] sm:$0xf]
    %v890 = vld [vmem:[%s18 + $0x24] sm:$0xf]
    %v891 = vld [vmem:[%s18 + $0x28] sm:$0xf]
    %v892 = vld [vmem:[%s18 + $0x2c] sm:$0xf]
    %v893 = vld [vmem:[%s18 + $0x30] sm:$0xf]
    %v894 = vld [vmem:[%s18 + $0x34] sm:$0xf]
    %v895 = vld [vmem:[%s18 + $0x38] sm:$0xf]
    %v896 = vld [vmem:[%s18 + $0x3c] sm:$0xf]
    %v897 = vld [vmem:[%s19] sm:$0x1]
    %v898 = vld [vmem:[%s20] sm:$0x1]
    %v899 = vld [vmem:[%s21] sm:$0x1]
    %v900 = vpack.c.bf16 %v844, %v843
    %v902 = vperm.slane %v861, 0
    %v920 = vunpack.c.l.b16 %v845
    %v921 = vunpack.c.l.b16 %v846
    %v922 = vunpack.c.l.b16 %v847
    %v923 = vunpack.c.l.b16 %v848
    %v924 = vunpack.c.l.b16 %v849
    %v925 = vunpack.c.l.b16 %v850
    %v926 = vunpack.c.l.b16 %v851
    %v927 = vunpack.c.l.b16 %v852
    %v928 = vunpack.c.l.b16 %v853
    %v929 = vunpack.c.l.b16 %v854
    %v930 = vunpack.c.l.b16 %v855
    %v931 = vunpack.c.l.b16 %v856
    %v932 = vunpack.c.l.b16 %v857
    %v933 = vunpack.c.l.b16 %v858
    %v934 = vunpack.c.l.b16 %v859
    %v935 = vunpack.c.l.b16 %v860
    %v936 = vpack.c.b16 %v921, %v920
    %v937 = vpack.c.b16 %v923, %v922
    %v938 = vpack.c.b16 %v925, %v924
    %v939 = vpack.c.b16 %v927, %v926
    %v940 = vpack.c.b16 %v929, %v928
    %v941 = vpack.c.b16 %v931, %v930
    %v942 = vpack.c.b16 %v933, %v932
    %v943 = vpack.c.b16 %v935, %v934
    %952 = vmatpush.bf16.msra.mxu0 %v943
    %953 = vmatpush.bf16.msra.mxu0 %v942
    %954 = vmatpush.bf16.msra.mxu0 %v941
    %955 = vmatpush.bf16.msra.mxu0 %v940
    %956 = vmatpush.bf16.msra.mxu0 %v939
    %957 = vmatpush.bf16.msra.mxu0 %v938
    %958 = vmatpush.bf16.msra.mxu0 %v937
    %959 = vmatpush.bf16.msra.mxu0 %v936
    %960 = vmatmul.bf16.gmra.mxu0 %v900
    %v961 = vpop.f32.mrf.mxu0
    %v962 = vadd.f32 %v902, %v961
    %v963 = vpop.f32.mrf.mxu0
    %v964 = vadd.f32 %v902, %v963
    %965 = vdwg.mxu0
    %v967 = vperm.slane %v878, 0
    %v985 = vunpack.c.l.b16 %v862
    %v986 = vunpack.c.l.b16 %v863
    %v987 = vunpack.c.l.b16 %v864
    %v988 = vunpack.c.l.b16 %v865
    %v989 = vunpack.c.l.b16 %v866
    %v990 = vunpack.c.l.b16 %v867
    %v991 = vunpack.c.l.b16 %v868
    %v992 = vunpack.c.l.b16 %v869
    %v993 = vunpack.c.l.b16 %v870
    %v994 = vunpack.c.l.b16 %v871
    %v995 = vunpack.c.l.b16 %v872
    %v996 = vunpack.c.l.b16 %v873
    %v997 = vunpack.c.l.b16 %v874
    %v998 = vunpack.c.l.b16 %v875
    %v999 = vunpack.c.l.b16 %v876
    %v1000 = vunpack.c.l.b16 %v877
    %v1001 = vpack.c.b16 %v986, %v985
    %v1002 = vpack.c.b16 %v988, %v987
    %v1003 = vpack.c.b16 %v990, %v989
    %v1004 = vpack.c.b16 %v992, %v991
    %v1005 = vpack.c.b16 %v994, %v993
    %v1006 = vpack.c.b16 %v996, %v995
    %v1007 = vpack.c.b16 %v998, %v997
    %v1008 = vpack.c.b16 %v1000, %v999
    %1017 = vmatpush.bf16.msra.mxu0 %v1008
    %1018 = vmatpush.bf16.msra.mxu0 %v1007
    %1019 = vmatpush.bf16.msra.mxu0 %v1006
    %1020 = vmatpush.bf16.msra.mxu0 %v1005
    %1021 = vmatpush.bf16.msra.mxu0 %v1004
    %1022 = vmatpush.bf16.msra.mxu0 %v1003
    %1023 = vmatpush.bf16.msra.mxu0 %v1002
    %1024 = vmatpush.bf16.msra.mxu0 %v1001
    %1025 = vmatmul.bf16.gmra.mxu0 %v900
    %v1026 = vpop.f32.mrf.mxu0
    %v1027 = vadd.f32 %v967, %v1026
    %v1028 = vpop.f32.mrf.mxu0
    %v1029 = vadd.f32 %v967, %v1028
    %1030 = vdwg.mxu0
    %v1031 = vpack.c.bf16 %v964, %v962
    %v1033 = vperm.slane %v879, 0
    %v1035 = vmul.f32 %v1027, %v1033
    %v1036 = vmul.f32 %v1029, %v1033
    %1037 = vadd.xlane.f32.xlu0 %v1035
    %v1038 = vpop.xlane.xlu0 %1037
    %1039 = vadd.xlane.f32.xlu0 %v1036
    %v1040 = vpop.xlane.xlu0 %1039
    %1041 = vmatpush.xpose.msra.mxu0 0.0
    %1042 = vmatpush.xpose.msra.mxu0 0.0
    %1043 = vmatpush.xpose.msra.mxu0 0.0
    %1044 = vmatpush.xpose.msra.mxu0 0.0
    %1045 = vmatpush.xpose.msra.mxu0 0.0
    %1046 = vmatpush.xpose.msra.mxu0 0.0
    %1047 = vmatpush.xpose.msra.mxu0 0.0
    %1048 = vmatpush.xpose.msra.mxu0 0.0
    %1049 = vmatpush.xpose.msra.mxu0 0.0
    %1050 = vmatpush.xpose.msra.mxu0 0.0
    %1051 = vmatpush.xpose.msra.mxu0 0.0
    %1052 = vmatpush.xpose.msra.mxu0 0.0
    %1053 = vmatpush.xpose.msra.mxu0 0.0
    %1054 = vmatpush.xpose.msra.mxu0 0.0
    %1055 = vmatpush.xpose.msra.mxu0 %v964
    %1056 = vmatpush.xpose.msra.mxu0 %v962
    %1057 = vmatmul.f32.gmra.mxu0 %v1033
    %v1058 = vpop.f32.mrf.mxu0
    %v1059 = vadd.f32 0.0, %v1058
    %1060 = vdwg.mxu0
    %v1063 = vrot.slane %v1027, 1
    %v1064 = vrot.slane %v1027, 2
    %v1065 = vrot.slane %v1027, 3
    %v1066 = vrot.slane %v1027, 4
    %v1067 = vrot.slane %v1027, 5
    %v1068 = vrot.slane %v1027, 6
    %v1069 = vrot.slane %v1027, 7
    %v1070 = vrot.slane %v1029, 1
    %v1071 = vrot.slane %v1029, 2
    %v1072 = vrot.slane %v1029, 3
    %v1073 = vrot.slane %v1029, 4
    %v1074 = vrot.slane %v1029, 5
    %v1075 = vrot.slane %v1029, 6
    %v1076 = vrot.slane %v1029, 7
    %v1077 = vperm.slane %v1027, 0
    %v1078 = vperm.slane %v1063, 0
    %v1079 = vperm.slane %v1064, 0
    %v1080 = vperm.slane %v1065, 0
    %v1081 = vperm.slane %v1066, 0
    %v1082 = vperm.slane %v1067, 0
    %v1083 = vperm.slane %v1068, 0
    %v1084 = vperm.slane %v1069, 0
    %v1085 = vperm.slane %v1029, 0
    %v1086 = vperm.slane %v1070, 0
    %v1087 = vperm.slane %v1071, 0
    %v1088 = vperm.slane %v1072, 0
    %v1089 = vperm.slane %v1073, 0
    %v1090 = vperm.slane %v1074, 0
    %v1091 = vperm.slane %v1075, 0
    %v1092 = vperm.slane %v1076, 0
    %v1109 = vadd.f32 %v962, %v1077
    %v1110 = vadd.f32 %v964, %v1077
    %v1111 = vadd.f32 %v962, %v1078
    %v1112 = vadd.f32 %v964, %v1078
    %v1113 = vadd.f32 %v962, %v1079
    %v1114 = vadd.f32 %v964, %v1079
    %v1115 = vadd.f32 %v962, %v1080
    %v1116 = vadd.f32 %v964, %v1080
    %v1117 = vadd.f32 %v962, %v1081
    %v1118 = vadd.f32 %v964, %v1081
    %v1119 = vadd.f32 %v962, %v1082
    %v1120 = vadd.f32 %v964, %v1082
    %v1121 = vadd.f32 %v962, %v1083
    %v1122 = vadd.f32 %v964, %v1083
    %v1123 = vadd.f32 %v962, %v1084
    %v1124 = vadd.f32 %v964, %v1084
    %v1125 = vadd.f32 %v962, %v1085
    %v1126 = vadd.f32 %v964, %v1085
    %v1127 = vadd.f32 %v962, %v1086
    %v1128 = vadd.f32 %v964, %v1086
    %v1129 = vadd.f32 %v962, %v1087
    %v1130 = vadd.f32 %v964, %v1087
    %v1131 = vadd.f32 %v962, %v1088
    %v1132 = vadd.f32 %v964, %v1088
    %v1133 = vadd.f32 %v962, %v1089
    %v1134 = vadd.f32 %v964, %v1089
    %v1135 = vadd.f32 %v962, %v1090
    %v1136 = vadd.f32 %v964, %v1090
    %v1137 = vadd.f32 %v962, %v1091
    %v1138 = vadd.f32 %v964, %v1091
    %v1139 = vadd.f32 %v962, %v1092
    %v1140 = vadd.f32 %v964, %v1092
    %v1141 = vand.u32 2147483647, %v1109
    %v1142 = vand.u32 2147483647, %v1110
    %v1143 = vand.u32 2147483647, %v1111
    %v1144 = vand.u32 2147483647, %v1112
    %v1145 = vand.u32 2147483647, %v1113
    %v1146 = vand.u32 2147483647, %v1114
    %v1147 = vand.u32 2147483647, %v1115
    %v1148 = vand.u32 2147483647, %v1116
    %v1149 = vand.u32 2147483647, %v1117
    %v1150 = vand.u32 2147483647, %v1118
    %v1151 = vand.u32 2147483647, %v1119
    %v1152 = vand.u32 2147483647, %v1120
    %v1153 = vand.u32 2147483647, %v1121
    %v1154 = vand.u32 2147483647, %v1122
    %v1155 = vand.u32 2147483647, %v1123
    %v1156 = vand.u32 2147483647, %v1124
    %v1157 = vand.u32 2147483647, %v1125
    %v1158 = vand.u32 2147483647, %v1126
    %v1159 = vand.u32 2147483647, %v1127
    %v1160 = vand.u32 2147483647, %v1128
    %v1161 = vand.u32 2147483647, %v1129
    %v1162 = vand.u32 2147483647, %v1130
    %v1163 = vand.u32 2147483647, %v1131
    %v1164 = vand.u32 2147483647, %v1132
    %v1165 = vand.u32 2147483647, %v1133
    %v1166 = vand.u32 2147483647, %v1134
    %v1167 = vand.u32 2147483647, %v1135
    %v1168 = vand.u32 2147483647, %v1136
    %v1169 = vand.u32 2147483647, %v1137
    %v1170 = vand.u32 2147483647, %v1138
    %v1171 = vand.u32 2147483647, %v1139
    %v1172 = vand.u32 2147483647, %v1140
    %v1173 = vperm.slane %v1059, 0
    %v1174 = vadd.f32 %v1038, %v1173
    %v1175 = vadd.f32 %v1040, %v1173
    %v1176 = vmul.f32 %v1174, 0.6
    %v1177 = vmul.f32 %v1175, 0.6
    %v1178 = vmul.f32 %v1141, %v1033
    %v1179 = vmul.f32 %v1142, %v1033
    %v1180 = vmul.f32 %v1143, %v1033
    %v1181 = vmul.f32 %v1144, %v1033
    %v1182 = vmul.f32 %v1145, %v1033
    %v1183 = vmul.f32 %v1146, %v1033
    %v1184 = vmul.f32 %v1147, %v1033
    %v1185 = vmul.f32 %v1148, %v1033
    %v1186 = vmul.f32 %v1149, %v1033
    %v1187 = vmul.f32 %v1150, %v1033
    %v1188 = vmul.f32 %v1151, %v1033
    %v1189 = vmul.f32 %v1152, %v1033
    %v1190 = vmul.f32 %v1153, %v1033
    %v1191 = vmul.f32 %v1154, %v1033
    %v1192 = vmul.f32 %v1155, %v1033
    %v1193 = vmul.f32 %v1156, %v1033
    %v1194 = vmul.f32 %v1157, %v1033
    %v1195 = vmul.f32 %v1158, %v1033
    %v1196 = vmul.f32 %v1159, %v1033
    %v1197 = vmul.f32 %v1160, %v1033
    %v1198 = vmul.f32 %v1161, %v1033
    %v1199 = vmul.f32 %v1162, %v1033
    %v1200 = vmul.f32 %v1163, %v1033
    %v1201 = vmul.f32 %v1164, %v1033
    %v1202 = vmul.f32 %v1165, %v1033
    %v1203 = vmul.f32 %v1166, %v1033
    %v1204 = vmul.f32 %v1167, %v1033
    %v1205 = vmul.f32 %v1168, %v1033
    %v1206 = vmul.f32 %v1169, %v1033
    %v1207 = vmul.f32 %v1170, %v1033
    %v1208 = vmul.f32 %v1171, %v1033
    %v1209 = vmul.f32 %v1172, %v1033
    %1210 = vadd.xlane.f32.xlu0 %v1178
    %v1211 = vpop.xlane.xlu0 %1210
    %1212 = vadd.xlane.f32.xlu0 %v1179
    %v1213 = vpop.xlane.xlu0 %1212
    %1214 = vadd.xlane.f32.xlu0 %v1180
    %v1215 = vpop.xlane.xlu0 %1214
    %1216 = vadd.xlane.f32.xlu0 %v1181
    %v1217 = vpop.xlane.xlu0 %1216
    %1218 = vadd.xlane.f32.xlu0 %v1182
    %v1219 = vpop.xlane.xlu0 %1218
    %1220 = vadd.xlane.f32.xlu0 %v1183
    %v1221 = vpop.xlane.xlu0 %1220
    %1222 = vadd.xlane.f32.xlu0 %v1184
    %v1223 = vpop.xlane.xlu0 %1222
    %1224 = vadd.xlane.f32.xlu0 %v1185
    %v1225 = vpop.xlane.xlu0 %1224
    %1226 = vadd.xlane.f32.xlu0 %v1186
    %v1227 = vpop.xlane.xlu0 %1226
    %1228 = vadd.xlane.f32.xlu0 %v1187
    %v1229 = vpop.xlane.xlu0 %1228
    %1230 = vadd.xlane.f32.xlu0 %v1188
    %v1231 = vpop.xlane.xlu0 %1230
    %1232 = vadd.xlane.f32.xlu0 %v1189
    %v1233 = vpop.xlane.xlu0 %1232
    %1234 = vadd.xlane.f32.xlu0 %v1190
    %v1235 = vpop.xlane.xlu0 %1234
    %1236 = vadd.xlane.f32.xlu0 %v1191
    %v1237 = vpop.xlane.xlu0 %1236
    %1238 = vadd.xlane.f32.xlu0 %v1192
    %v1239 = vpop.xlane.xlu0 %1238
    %1240 = vadd.xlane.f32.xlu0 %v1193
    %v1241 = vpop.xlane.xlu0 %1240
    %1242 = vadd.xlane.f32.xlu0 %v1194
    %v1243 = vpop.xlane.xlu0 %1242
    %1244 = vadd.xlane.f32.xlu0 %v1195
    %v1245 = vpop.xlane.xlu0 %1244
    %1246 = vadd.xlane.f32.xlu0 %v1196
    %v1247 = vpop.xlane.xlu0 %1246
    %1248 = vadd.xlane.f32.xlu0 %v1197
    %v1249 = vpop.xlane.xlu0 %1248
    %1250 = vadd.xlane.f32.xlu0 %v1198
    %v1251 = vpop.xlane.xlu0 %1250
    %1252 = vadd.xlane.f32.xlu0 %v1199
    %v1253 = vpop.xlane.xlu0 %1252
    %1254 = vadd.xlane.f32.xlu0 %v1200
    %v1255 = vpop.xlane.xlu0 %1254
    %1256 = vadd.xlane.f32.xlu0 %v1201
    %v1257 = vpop.xlane.xlu0 %1256
    %1258 = vadd.xlane.f32.xlu0 %v1202
    %v1259 = vpop.xlane.xlu0 %1258
    %1260 = vadd.xlane.f32.xlu0 %v1203
    %v1261 = vpop.xlane.xlu0 %1260
    %1262 = vadd.xlane.f32.xlu0 %v1204
    %v1263 = vpop.xlane.xlu0 %1262
    %1264 = vadd.xlane.f32.xlu0 %v1205
    %v1265 = vpop.xlane.xlu0 %1264
    %1266 = vadd.xlane.f32.xlu0 %v1206
    %v1267 = vpop.xlane.xlu0 %1266
    %1268 = vadd.xlane.f32.xlu0 %v1207
    %v1269 = vpop.xlane.xlu0 %1268
    %1270 = vadd.xlane.f32.xlu0 %v1208
    %v1271 = vpop.xlane.xlu0 %1270
    %1272 = vadd.xlane.f32.xlu0 %v1209
    %v1273 = vpop.xlane.xlu0 %1272
    %v1274 = vmul.f32 %v1211, 0.4
    %v1275 = vmul.f32 %v1213, 0.4
    %v1276 = vmul.f32 %v1215, 0.4
    %v1277 = vmul.f32 %v1217, 0.4
    %v1278 = vmul.f32 %v1219, 0.4
    %v1279 = vmul.f32 %v1221, 0.4
    %v1280 = vmul.f32 %v1223, 0.4
    %v1281 = vmul.f32 %v1225, 0.4
    %v1282 = vmul.f32 %v1227, 0.4
    %v1283 = vmul.f32 %v1229, 0.4
    %v1284 = vmul.f32 %v1231, 0.4
    %v1285 = vmul.f32 %v1233, 0.4
    %v1286 = vmul.f32 %v1235, 0.4
    %v1287 = vmul.f32 %v1237, 0.4
    %v1288 = vmul.f32 %v1239, 0.4
    %v1289 = vmul.f32 %v1241, 0.4
    %v1290 = vmul.f32 %v1243, 0.4
    %v1291 = vmul.f32 %v1245, 0.4
    %v1292 = vmul.f32 %v1247, 0.4
    %v1293 = vmul.f32 %v1249, 0.4
    %v1294 = vmul.f32 %v1251, 0.4
    %v1295 = vmul.f32 %v1253, 0.4
    %v1296 = vmul.f32 %v1255, 0.4
    %v1297 = vmul.f32 %v1257, 0.4
    %v1298 = vmul.f32 %v1259, 0.4
    %v1299 = vmul.f32 %v1261, 0.4
    %v1300 = vmul.f32 %v1263, 0.4
    %v1301 = vmul.f32 %v1265, 0.4
    %v1302 = vmul.f32 %v1267, 0.4
    %v1303 = vmul.f32 %v1269, 0.4
    %v1304 = vmul.f32 %v1271, 0.4
    %v1305 = vmul.f32 %v1273, 0.4
    %v1338 = vperm.slane %v1274, %v577
    %v1339 = vperm.slane %v1275, %v579
    %v1340 = vsel %vm581, %v1339, %v1338
    %v1341 = vperm.slane %v1276, %v577
    %v1342 = vperm.slane %v1277, %v579
    %v1343 = vsel %vm581, %v1342, %v1341
    %v1344 = vperm.slane %v1278, %v577
    %v1345 = vperm.slane %v1279, %v579
    %v1346 = vsel %vm581, %v1345, %v1344
    %v1347 = vperm.slane %v1280, %v577
    %v1348 = vperm.slane %v1281, %v579
    %v1349 = vsel %vm581, %v1348, %v1347
    %v1350 = vperm.slane %v1282, %v577
    %v1351 = vperm.slane %v1283, %v579
    %v1352 = vsel %vm581, %v1351, %v1350
    %v1353 = vperm.slane %v1284, %v577
    %v1354 = vperm.slane %v1285, %v579
    %v1355 = vsel %vm581, %v1354, %v1353
    %v1356 = vperm.slane %v1286, %v577
    %v1357 = vperm.slane %v1287, %v579
    %v1358 = vsel %vm581, %v1357, %v1356
    %v1359 = vperm.slane %v1288, %v577
    %v1360 = vperm.slane %v1289, %v579
    %v1361 = vsel %vm581, %v1360, %v1359
    %v1362 = vperm.slane %v1290, %v577
    %v1363 = vperm.slane %v1291, %v579
    %v1364 = vsel %vm581, %v1363, %v1362
    %v1365 = vperm.slane %v1292, %v577
    %v1366 = vperm.slane %v1293, %v579
    %v1367 = vsel %vm581, %v1366, %v1365
    %v1368 = vperm.slane %v1294, %v577
    %v1369 = vperm.slane %v1295, %v579
    %v1370 = vsel %vm581, %v1369, %v1368
    %v1371 = vperm.slane %v1296, %v577
    %v1372 = vperm.slane %v1297, %v579
    %v1373 = vsel %vm581, %v1372, %v1371
    %v1374 = vperm.slane %v1298, %v577
    %v1375 = vperm.slane %v1299, %v579
    %v1376 = vsel %vm581, %v1375, %v1374
    %v1377 = vperm.slane %v1300, %v577
    %v1378 = vperm.slane %v1301, %v579
    %v1379 = vsel %vm581, %v1378, %v1377
    %v1380 = vperm.slane %v1302, %v577
    %v1381 = vperm.slane %v1303, %v579
    %v1382 = vsel %vm581, %v1381, %v1380
    %v1383 = vperm.slane %v1304, %v577
    %v1384 = vperm.slane %v1305, %v579
    %v1385 = vsel %vm581, %v1384, %v1383
    %v1386 = vsel %vm628, %v1343, %v1340
    %v1387 = vsel %vm630, %v1346, %v1386
    %v1388 = vsel %vm632, %v1349, %v1387
    %v1389 = vsel %vm634, %v1352, %v1388
    %v1390 = vsel %vm636, %v1355, %v1389
    %v1391 = vsel %vm638, %v1358, %v1390
    %v1392 = vsel %vm640, %v1361, %v1391
    %v1393 = vsel %vm628, %v1367, %v1364
    %v1394 = vsel %vm630, %v1370, %v1393
    %v1395 = vsel %vm632, %v1373, %v1394
    %v1396 = vsel %vm634, %v1376, %v1395
    %v1397 = vsel %vm636, %v1379, %v1396
    %v1398 = vsel %vm638, %v1382, %v1397
    %v1399 = vsel %vm640, %v1385, %v1398
    %v1402 = vadd.f32 %v1176, %v1392
    %v1403 = vadd.f32 %v1177, %v1399
    %v1404 = vsel %vm79, %v1402, -1e+30
    %v1405 = vsel %vm80, %v1403, -1e+30
    %v1406 = vsel %vm655, %v1404, -inf
    %1407 = vmax.xlane.f32.xlu0 %v1406
    %v1408 = vpop.xlane.xlu0 %1407
    %v1409 = vsel %vm655, %v1405, -inf
    %1410 = vmax.xlane.f32.xlu0 %v1409
    %v1411 = vpop.xlane.xlu0 %1410
    %v1412 = vmax.f32 %v1408, -1e+30
    %v1413 = vmax.f32 %v1411, -1e+30
    %v1414 = vsub.f32 -1e+30, %v1412
    %v1415 = vsub.f32 -1e+30, %v1413
    %v1416 = vmul.f32 %v1414, 1.442695
    %v1417 = vpow.pop %v1416
    %v1418 = vmul.f32 %v1415, 1.442695
    %v1419 = vpow.pop %v1418
    %v1420 = vsub.f32 %v1404, %v1412
    %v1421 = vsub.f32 %v1405, %v1413
    %v1422 = vmul.f32 %v1420, 1.442695
    %v1423 = vpow.pop %v1422
    %v1424 = vmul.f32 %v1421, 1.442695
    %v1425 = vpow.pop %v1424
    %v1426 = vmul.f32 %v77, %v1423
    %v1427 = vmul.f32 %v78, %v1425
    %v1428 = vmul.f32 %v1417, 0.0
    %v1429 = vmul.f32 %v1419, 0.0
    %v1430 = vsel %vm655, %v1426, 0.0
    %1431 = vadd.xlane.f32.xlu0 %v1430
    %v1432 = vpop.xlane.xlu0 %1431
    %v1433 = vsel %vm655, %v1427, 0.0
    %1434 = vadd.xlane.f32.xlu0 %v1433
    %v1435 = vpop.xlane.xlu0 %1434
    %v1436 = vadd.f32 %v1428, %v1432
    %v1437 = vadd.f32 %v1429, %v1435
    %v1438 = vpack.c.bf16 %v1427, %v1426
    %v1440 = vsel %vm655, %v1438, 0
    %1442 = vmatpush.bf16.msra.mxu0 0
    %1443 = vmatpush.bf16.msra.mxu0 0
    %1444 = vmatpush.bf16.msra.mxu0 0
    %1445 = vmatpush.bf16.msra.mxu0 0
    %1446 = vmatpush.bf16.msra.mxu0 0
    %1447 = vmatpush.bf16.msra.mxu0 0
    %1448 = vmatpush.bf16.msra.mxu0 0
    %1449 = vmatpush.bf16.msra.mxu0 %v1031
    %1450 = vmatmul.bf16.gmra.mxu0 %v1440
    %v1451 = vpop.f32.mrf.mxu0
    %v1452 = vadd.f32 0.0, %v1451
    %v1453 = vpop.f32.mrf.mxu0
    %v1454 = vadd.f32 0.0, %v1453
    %1455 = vdwg.mxu0
    %v1456 = vadd.f32 %v1428, %v1452
    %v1457 = vadd.f32 %v1429, %v1454
    %v1458 = vmax.f32 %v1436, 1.0
    %v1459 = vmax.f32 %v1437, 1.0
    %v1460 = vrcp.pop %v1458
    %v1461 = vrcp.pop %v1459
    %v1462 = vmul.f32 %v1456, %v1460
    %v1463 = vmul.f32 %v1457, %v1461
    %v1465 = vperm.slane %v880, 0
    %v1467 = vadd.f32 %v1462, %v1465
    %v1468 = vadd.f32 %v1463, %v1465
    %1469 = vst [vmem:[#allocation2] sm:$0xff] %v1467
    %1470 = vst [vmem:[#allocation2 + $0x8] sm:$0xff] %v1468
    %v1471 = vld [vmem:[#allocation2] sm:$0xff]
    %v1472 = vld [vmem:[#allocation2 + $0x8] sm:$0xff]
    %v1473 = vpack.c.bf16 %v1472, %v1471
    %v1490 = vunpack.c.l.b16 %v881
    %v1491 = vunpack.c.l.b16 %v882
    %v1492 = vunpack.c.l.b16 %v883
    %v1493 = vunpack.c.l.b16 %v884
    %v1494 = vunpack.c.l.b16 %v885
    %v1495 = vunpack.c.l.b16 %v886
    %v1496 = vunpack.c.l.b16 %v887
    %v1497 = vunpack.c.l.b16 %v888
    %v1498 = vunpack.c.l.b16 %v889
    %v1499 = vunpack.c.l.b16 %v890
    %v1500 = vunpack.c.l.b16 %v891
    %v1501 = vunpack.c.l.b16 %v892
    %v1502 = vunpack.c.l.b16 %v893
    %v1503 = vunpack.c.l.b16 %v894
    %v1504 = vunpack.c.l.b16 %v895
    %v1505 = vunpack.c.l.b16 %v896
    %v1506 = vpack.c.b16 %v1491, %v1490
    %v1507 = vpack.c.b16 %v1493, %v1492
    %v1508 = vpack.c.b16 %v1495, %v1494
    %v1509 = vpack.c.b16 %v1497, %v1496
    %v1510 = vpack.c.b16 %v1499, %v1498
    %v1511 = vpack.c.b16 %v1501, %v1500
    %v1512 = vpack.c.b16 %v1503, %v1502
    %v1513 = vpack.c.b16 %v1505, %v1504
    %1522 = vmatpush.bf16.msra.mxu0 %v1513
    %1523 = vmatpush.bf16.msra.mxu0 %v1512
    %1524 = vmatpush.bf16.msra.mxu0 %v1511
    %1525 = vmatpush.bf16.msra.mxu0 %v1510
    %1526 = vmatpush.bf16.msra.mxu0 %v1509
    %1527 = vmatpush.bf16.msra.mxu0 %v1508
    %1528 = vmatpush.bf16.msra.mxu0 %v1507
    %1529 = vmatpush.bf16.msra.mxu0 %v1506
    %1530 = vmatmul.bf16.gmra.mxu0 %v1473
    %v1531 = vpop.f32.mrf.mxu0
    %v1532 = vadd.f32 0.0, %v1531
    %v1533 = vpop.f32.mrf.mxu0
    %v1534 = vadd.f32 0.0, %v1533
    %1535 = vdwg.mxu0
    %v1536 = vadd.f32 %v1471, %v1532
    %v1537 = vadd.f32 %v1472, %v1534
    %v1539 = vperm.slane %v897, 0
    %v1541 = vadd.f32 %v1536, %v1539
    %v1542 = vadd.f32 %v1537, %v1539
    %v1543 = vadd.f32 %v1541, %v1542
    %v1544 = vrot.slane %v1543, 4
    %v1545 = vadd.f32 %v1543, %v1544
    %v1546 = vrot.slane %v1545, 2
    %v1547 = vadd.f32 %v1545, %v1546
    %v1548 = vrot.slane %v1547, 1
    %v1549 = vadd.f32 %v1547, %v1548
    %v1550 = vmul.f32 %v1549, %v806
    %v1551 = vsub.f32 %v1541, %v1550
    %v1552 = vsub.f32 %v1542, %v1550
    %v1553 = vmul.f32 %v1551, %v1551
    %v1554 = vmul.f32 %v1552, %v1552
    %v1555 = vadd.f32 %v1553, %v1554
    %v1556 = vrot.slane %v1555, 4
    %v1557 = vadd.f32 %v1555, %v1556
    %v1558 = vrot.slane %v1557, 2
    %v1559 = vadd.f32 %v1557, %v1558
    %v1560 = vrot.slane %v1559, 1
    %v1561 = vadd.f32 %v1559, %v1560
    %v1562 = vmul.f32 %v1561, %v806
    %v1563 = vadd.f32 %v1562, 1e-05
    %v1564 = vrsqrt.pop %v1563
    %v1565 = vmul.f32 %v1564, %v1563
    %v1566 = vmul.f32 %v1565, %v1564
    %v1567 = vmul.f32 0.5, %v1566
    %v1568 = vsub.f32 1.5, %v1567
    %v1569 = vmul.f32 %v1564, %v1568
    %vm1570 = vweird.f32 %v1563
    %vm1571 = vweird.f32 %v1564
    %vm1572 = vmor %vm1570, %vm1571
    %v1573 = vsel %vm1572, %v1564, %v1569
    %v1574 = vmul.f32 %v1551, %v1573
    %v1575 = vmul.f32 %v1552, %v1573
    %v1577 = vperm.slane %v898, 0
    %v1579 = vmul.f32 %v1574, %v1577
    %v1580 = vmul.f32 %v1575, %v1577
    %v1582 = vperm.slane %v899, 0
    %v1584 = vadd.f32 %v1579, %v1582
    %v1585 = vadd.f32 %v1580, %v1582
    %1586 = vst [vmem:[#allocation3] sm:$0xff] %v1584
    %1587 = vst [vmem:[#allocation3 + $0x8] sm:$0xff] %v1585
    // Predicated region
    $region90: #{encoder_forward.1} parent=1 // pred_check
      _
    $region91: #{encoder_forward.1} parent=1 // pred_check_branch
      %1589 = sbr.rel (0) target = $region93
    $region92: #{encoder_forward.1} parent=1 // pred_region
      %1591 = vsyncadd [#allocation4], 0
      %s1592 = sshll.u32 [#allocation3], 4
      %s1593 = int_to_ptr.vmem [resolvable:$true] %s1592
      %s1594 = sshll.u32 %s22, 4
      %s1595 = int_to_ptr.hbm [resolvable:$true] %s1594
      %1600 = dma.vmem_to_hbm [thread:$0]  %s1593, 256, %s1595, [#allocation4], 128, 128, 8
    $region93: #{encoder_forward.1} parent=1 // pred_fallthru
      _
    // Predicated region
    $region94: #{encoder_forward.1} parent=1 // pred_check
      _
    $region95: #{encoder_forward.1} parent=1 // pred_check_branch
      %1602 = sbr.rel (0) target = $region97
    $region96: #{encoder_forward.1} parent=1 // pred_region
      %1604 = dma.done [#allocation4], 256
    $region97: #{encoder_forward.1} parent=1 // pred_fallthru
      _
    %1605 = vsyncpa [#allocation4], 1

</llo_original>
